<compile_context>
chip_gen: v5e
topology: v5e:2x2
jax: 0.10.0
libtpu: 0.0.40
codegen_flags: <defaults>
</compile_context>

<pallas_src>
import math

import jax
import jax.numpy as jnp
from jax.experimental import pallas as pl
from jax.experimental.pallas import tpu as pltpu

ROW_ALIGN = 256       # patch-row padding granularity
MAX_ROW_TILE = 1024   # head GEMM row tile cap (fits scoped VMEM on v5e/v6e/v7x)


def _round_up(x, m):
    return (x + m - 1) // m * m


def _pick_row_tile(np_pad):
    """Largest multiple of 256 that divides np_pad, <= MAX_ROW_TILE, preferring
    >= 2 grid steps so both TensorCores get work on dual-TC chips (v7x)."""
    cap = min(MAX_ROW_TILE, np_pad)
    if np_pad >= 2 * ROW_ALIGN:
        cap = min(cap, np_pad // 2)
    cap = max(ROW_ALIGN, (cap // ROW_ALIGN) * ROW_ALIGN)
    t = cap
    while t > ROW_ALIGN and np_pad % t:
        t -= ROW_ALIGN
    return t


# ---------------------------------------------------------------------------
# Pallas kernel: fused RPN head + bbox decode
#   (3x3 conv as full-K GEMM) -> ReLU -> fused 1x1 cls+reg head
#   -> sigmoid(scores) + delta2bbox(anchors) + clamp to image
# ---------------------------------------------------------------------------
def _make_fused_head_kernel(A, max_ratio, max_x, max_y, means, stds):
    mx, my, mw, mh = (float(v) for v in means)
    sx, sy, sw, sh = (float(v) for v in stds)

    def kernel(p_ref, wc_ref, bc_ref, wh_ref, bh_ref, anc_ref, sc_ref, pr_ref):
        # 3x3 conv (im2col GEMM over the full K block) + bias + ReLU
        h = jnp.dot(p_ref[...], wc_ref[...], preferred_element_type=jnp.float32)
        h = jnp.maximum(h + bc_ref[...], 0.0).astype(wh_ref.dtype)
        # fused 1x1 head: lanes [0:A]=cls logits, [A + c*A + a]=delta coord c
        o = (jnp.dot(h, wh_ref[...], preferred_element_type=jnp.float32)
             + bh_ref[...])

        # scores
        sc_ref[...] = jax.nn.sigmoid(o[:, 0:A])

        # delta2bbox (new-style convention: w = x2 - x1, clamp to [0, W]/[0, H])
        dx = o[:, A:2 * A] * sx + mx
        dy = o[:, 2 * A:3 * A] * sy + my
        dw = jnp.clip(o[:, 3 * A:4 * A] * sw + mw, -max_ratio, max_ratio)
        dh = jnp.clip(o[:, 4 * A:5 * A] * sh + mh, -max_ratio, max_ratio)

        ax1 = anc_ref[:, 0:A]
        ay1 = anc_ref[:, A:2 * A]
        ax2 = anc_ref[:, 2 * A:3 * A]
        ay2 = anc_ref[:, 3 * A:4 * A]
        aw = ax2 - ax1
        ah = ay2 - ay1
        acx = (ax1 + ax2) * 0.5
        acy = (ay1 + ay2) * 0.5
        gw = aw * jnp.exp(dw)
        gh = ah * jnp.exp(dh)
        gcx = acx + aw * dx
        gcy = acy + ah * dy

        pr_ref[:, 0:A] = jnp.clip(gcx - gw * 0.5, 0.0, max_x)
        pr_ref[:, A:2 * A] = jnp.clip(gcy - gh * 0.5, 0.0, max_y)
        pr_ref[:, 2 * A:3 * A] = jnp.clip(gcx + gw * 0.5, 0.0, max_x)
        pr_ref[:, 3 * A:4 * A] = jnp.clip(gcy + gh * 0.5, 0.0, max_y)

    return kernel


def rpn_head_decode_pallas(patches, anc_slab, wc, bc, wh, bh, A,
                           max_ratio, max_x, max_y, means, stds):
    n, Kpad = patches.shape
    Fpad = wc.shape[1]
    OUTPAD = wh.shape[1]
    t = _pick_row_tile(n)
    kernel = _make_fused_head_kernel(A, max_ratio, max_x, max_y, means, stds)
    # NOTE: the constant-index weight/bias blocks could also use
    # pipeline_mode=pl.Buffered(1) to drop their dead second pipeline buffer.
    return pl.pallas_call(
        kernel,
        out_shape=(jax.ShapeDtypeStruct((n, A), jnp.float32),
                   jax.ShapeDtypeStruct((n, 4 * A), jnp.float32)),
        grid=(n // t,),
        in_specs=[
            pl.BlockSpec((t, Kpad), lambda i: (i, 0)),        # im2col patches (bf16)
            pl.BlockSpec((Kpad, Fpad), lambda i: (0, 0)),     # conv weight (resident)
            pl.BlockSpec((1, Fpad), lambda i: (0, 0)),        # conv bias (f32)
            pl.BlockSpec((Fpad, OUTPAD), lambda i: (0, 0)),   # fused cls+reg weight
            pl.BlockSpec((1, OUTPAD), lambda i: (0, 0)),      # fused cls+reg bias
            pl.BlockSpec((t, 4 * A), lambda i: (i, 0)),       # anchor slab (f32)
        ],
        out_specs=(pl.BlockSpec((t, A), lambda i: (i, 0)),       # scores
                   pl.BlockSpec((t, 4 * A), lambda i: (i, 0))),  # proposals
        compiler_params=pltpu.CompilerParams(
            dimension_semantics=("parallel",),
            vmem_limit_bytes=40 * 1024 * 1024),
    )(patches, wc, bc, wh, bh, anc_slab)


# ---------------------------------------------------------------------------
# JAX glue: im2col, anchors, params, full forward
# ---------------------------------------------------------------------------
def im2col_3x3(x_nhwc, Kpad):
    """3x3, pad=1, stride=1 im2col with the lane pad fused into the concat.
    Rows ordered (b, h, w); lanes ordered (ky, kx, cin), then zero lane pad."""
    B, H, W, C = x_nhwc.shape
    xp = jnp.pad(x_nhwc, ((0, 0), (1, 1), (1, 1), (0, 0)))
    cols = [xp[:, ky:ky + H, kx:kx + W, :] for ky in range(3) for kx in range(3)]
    if Kpad > 9 * C:
        cols.append(jnp.zeros((B, H, W, Kpad - 9 * C), x_nhwc.dtype))
    return jnp.concatenate(cols, axis=-1).reshape(B * H * W, Kpad)


def gen_anchors(H, W, stride, scales, ratios):
    # mmdet AnchorGenerator (center_offset=0), location-major, anchor-minor
    base = float(stride)
    h_ratios = jnp.sqrt(jnp.asarray(ratios, jnp.float32))
    w_ratios = 1.0 / h_ratios
    scales = jnp.asarray(scales, jnp.float32)
    ws = (base * w_ratios[:, None] * scales[None, :]).reshape(-1)
    hs = (base * h_ratios[:, None] * scales[None, :]).reshape(-1)
    base_anchors = jnp.stack([-0.5 * ws, -0.5 * hs, 0.5 * ws, 0.5 * hs], axis=-1)
    shift_x = jnp.arange(W, dtype=jnp.float32) * stride
    shift_y = jnp.arange(H, dtype=jnp.float32) * stride
    sx, sy = jnp.meshgrid(shift_x, shift_y)
    shifts = jnp.stack([sx.ravel(), sy.ravel(), sx.ravel(), sy.ravel()], axis=-1)
    anchors = (shifts[:, None, :] + base_anchors[None, :, :]).reshape(-1, 4)
    return anchors.astype(jnp.float32)


def prep_anchor_slab(anchors, A, B, np_pad):
    """(Nloc*A, 4) anchors -> (np_pad, 4A) coordinate-major slab whose rows
    match the (b, h, w) patch-row order of the head kernel."""
    Nloc = anchors.shape[0] // A
    slab = anchors.reshape(Nloc, A, 4)
    slab = jnp.transpose(slab, (0, 2, 1)).reshape(Nloc, 4 * A)  # lane j = c*A + a
    slab = jnp.tile(slab, (B, 1))                               # batch-major rows
    pad = np_pad - B * Nloc
    if pad:
        slab = jnp.pad(slab, ((0, pad), (0, 0)))
    return slab.astype(jnp.float32)


def init_params(key, in_channels, feat_channels, num_anchors):
    k = jax.random.split(key, 6)
    return dict(
        w_conv=jax.random.normal(k[0], (feat_channels, in_channels, 3, 3), jnp.float32) * 0.1,
        b_conv=jax.random.normal(k[1], (feat_channels,), jnp.float32) * 0.1,
        w_cls=jax.random.normal(k[2], (num_anchors, feat_channels, 1, 1), jnp.float32) * 0.1,
        b_cls=jax.random.normal(k[3], (num_anchors,), jnp.float32) * 0.1,
        w_reg=jax.random.normal(k[4], (num_anchors * 4, feat_channels, 1, 1), jnp.float32) * 0.1,
        b_reg=jax.random.normal(k[5], (num_anchors * 4,), jnp.float32) * 0.1,
    )


def pack_params(p, in_channels, feat_channels, num_anchors):
    K = 9 * in_channels
    A = num_anchors
    assert 5 * A <= 128, "fused cls+reg head assumes 5*A <= 128 lanes"
    Kpad = _round_up(K, 128)
    Fpad = _round_up(feat_channels, 128)
    OUTPAD = 128

    wc = jnp.zeros((Kpad, Fpad), jnp.bfloat16).at[:K, :feat_channels].set(
        jnp.transpose(p["w_conv"], (2, 3, 1, 0)).reshape(K, feat_channels)
        .astype(jnp.bfloat16))
    bc = jnp.zeros((1, Fpad), jnp.float32).at[0, :feat_channels].set(p["b_conv"])

    # coordinate-major reorder of the reg head (out lane A + c*A + a takes conv
    # channel a*4 + c) so the fused decode uses contiguous lane slices.
    perm = jnp.asarray([a * 4 + c for c in range(4) for a in range(A)], jnp.int32)
    w_reg2d = p["w_reg"][:, :, 0, 0][perm]     # (4A, F)
    b_reg = p["b_reg"][perm]

    wh = jnp.zeros((Fpad, OUTPAD), jnp.bfloat16)
    wh = wh.at[:feat_channels, :A].set(p["w_cls"][:, :, 0, 0].T.astype(jnp.bfloat16))
    wh = wh.at[:feat_channels, A:5 * A].set(w_reg2d.T.astype(jnp.bfloat16))
    bh = jnp.zeros((1, OUTPAD), jnp.float32)
    bh = bh.at[0, :A].set(p["b_cls"]).at[0, A:5 * A].set(b_reg)
    return (wc, bc, wh, bh)


def rpn_level(feat, anchors, packed, A, img_hw,
              means=(0.0, 0.0, 0.0, 0.0), stds=(1.0, 1.0, 1.0, 1.0),
              wh_ratio_clip=16.0 / 1000.0):
    """One FPN level. Returns scores (B, N) and proposals (B, 4, N)."""
    wc, bc, wh, bh = packed
    Kpad = wc.shape[0]
    B, Cin, H, W = feat.shape
    Np = B * H * W
    np_pad = _round_up(Np, ROW_ALIGN)

    nhwc = jnp.transpose(feat, (0, 2, 3, 1)).astype(jnp.bfloat16)
    patches = im2col_3x3(nhwc, Kpad)                       # (Np, Kpad), lane pad fused
    if np_pad != Np:
        # Only hit when B*H*W isn't 256-aligned (tiny demo levels).
        patches = jnp.pad(patches, ((0, np_pad - Np), (0, 0)))
    anc_slab = prep_anchor_slab(anchors, A, B, np_pad)     # (np_pad, 4A)

    max_ratio = abs(math.log(wh_ratio_clip))
    sc, pr = rpn_head_decode_pallas(
        patches, anc_slab, wc, bc, wh, bh, A, max_ratio,
        float(img_hw[1]), float(img_hw[0]), means, stds)
    # sc: (np_pad, A); pr: (np_pad, 4A) coordinate-major lanes

    N = H * W * A
    scores = sc[:Np].reshape(B, N)
    props = pr[:Np].reshape(B, H * W, 4, A)
    props = jnp.transpose(props, (0, 2, 1, 3)).reshape(B, 4, N)   # lane-dense box axis
    return scores, props


def rpn_head_forward(feats, x, packed, anchors_list, cfg, num_anchors):
    img_h, img_w = int(x.shape[2]), int(x.shape[3])
    mlvl_scores, mlvl_props = [], []

    for feat, anchors in zip(feats, anchors_list):
        scores, props = rpn_level(feat, anchors, packed, num_anchors, (img_h, img_w))
        # TODO(synk): BatchedNMS IoU suppression has no clean Pallas/TPU
        # equivalent; approximated by keeping the nms_post top boxes per level.
        k = min(cfg["nms_post"], scores.shape[1])
        sc_top, idx = jax.lax.top_k(scores, k)
        props_top = jnp.take_along_axis(props, idx[:, None, :], axis=2)  # (B,4,k)
        mlvl_scores.append(sc_top)
        mlvl_props.append(props_top)

    scores = jnp.concatenate(mlvl_scores, axis=1)                 # (B, sum_k)
    props = jnp.concatenate(mlvl_props, axis=2)                   # (B, 4, sum_k)
    max_num = min(cfg["max_num"], scores.shape[1])
    _, topk_inds = jax.lax.top_k(scores, max_num)
    props = jnp.take_along_axis(props, topk_inds[:, None, :], axis=2)  # (B,4,M)
    return jnp.transpose(props, (0, 2, 1))                        # (B, M, 4)


# ---------------------------------------------------------------------------
# Pure-JAX f32 reference (per level, pre-topk) for a tolerance check
# ---------------------------------------------------------------------------
def reference_level(feat, params, anchors, A, img_hw,
                    means=(0.0, 0.0, 0.0, 0.0), stds=(1.0, 1.0, 1.0, 1.0),
                    wh_ratio_clip=16.0 / 1000.0):
    B, Cin, H, W = feat.shape
    nhwc = jnp.transpose(feat, (0, 2, 3, 1))
    xp = jnp.pad(nhwc, ((0, 0), (1, 1), (1, 1), (0, 0)))
    cols = [xp[:, ky:ky + H, kx:kx + W, :] for ky in range(3) for kx in range(3)]
    patches = jnp.concatenate(cols, axis=-1).reshape(B * H * W, 9 * Cin)
    wck = jnp.transpose(params["w_conv"], (2, 3, 1, 0)).reshape(9 * Cin, -1)
    h = jnp.maximum(patches @ wck + params["b_conv"], 0.0)
    cls = h @ params["w_cls"][:, :, 0, 0].T + params["b_cls"]      # (Np, A)
    reg = h @ params["w_reg"][:, :, 0, 0].T + params["b_reg"]      # (Np, 4A) anchor-major
    N = H * W * A
    scores = jax.nn.sigmoid(cls).reshape(B, N)
    deltas = reg.reshape(B, N, 4)
    anc = jnp.broadcast_to(anchors[None], (B,) + anchors.shape)
    mx, my, mw, mh = means
    sx, sy, sw, sh = stds
    max_ratio = abs(math.log(wh_ratio_clip))
    dx = deltas[..., 0] * sx + mx
    dy = deltas[..., 1] * sy + my
    dw = jnp.clip(deltas[..., 2] * sw + mw, -max_ratio, max_ratio)
    dh = jnp.clip(deltas[..., 3] * sh + mh, -max_ratio, max_ratio)
    ax1, ay1, ax2, ay2 = anc[..., 0], anc[..., 1], anc[..., 2], anc[..., 3]
    aw, ah = ax2 - ax1, ay2 - ay1
    acx, acy = (ax1 + ax2) * 0.5, (ay1 + ay2) * 0.5
    gw, gh = aw * jnp.exp(dw), ah * jnp.exp(dh)
    gcx, gcy = acx + aw * dx, acy + ah * dy
    img_h, img_w = img_hw
    x1 = jnp.clip(gcx - gw * 0.5, 0.0, img_w)
    y1 = jnp.clip(gcy - gh * 0.5, 0.0, img_h)
    x2 = jnp.clip(gcx + gw * 0.5, 0.0, img_w)
    y2 = jnp.clip(gcy + gh * 0.5, 0.0, img_h)
    return scores, jnp.stack([x1, y1, x2, y2], axis=-1)            # (B,N), (B,N,4)


if __name__ == "__main__":
    key = jax.random.PRNGKey(0)
    in_channels, feat_channels, num_anchors = 4, 8, 3
    B, img_h, img_w = 2, 64, 64

    k1, k2, k3, kp = jax.random.split(key, 4)
    feat0 = jax.random.normal(k1, (B, in_channels, 16, 16), jnp.float32)
    feat1 = jax.random.normal(k2, (B, in_channels, 8, 8), jnp.float32)
    x = jax.random.normal(k3, (B, 3, img_h, img_w), jnp.float32)

    params = init_params(kp, in_channels, feat_channels, num_anchors)
    packed = pack_params(params, in_channels, feat_channels, num_anchors)

    scales, ratios = (8.0,), (0.5, 1.0, 2.0)   # 3 anchors / location
    anchors0 = gen_anchors(16, 16, 4, scales, ratios)
    anchors1 = gen_anchors(8, 8, 8, scales, ratios)

    cfg = dict(nms_pre=64, nms_post=32, max_num=48, nms_thr=0.7)

    # per-level tolerance check (kernel bf16 GEMMs vs pure-f32 reference)
    for feat, anc in ((feat0, anchors0), (feat1, anchors1)):
        sc_k, pr_k = rpn_level(feat, anc, packed, num_anchors, (img_h, img_w))
        pr_k = jnp.transpose(pr_k, (0, 2, 1))                       # (B, N, 4)
        sc_r, pr_r = reference_level(feat, params, anc, num_anchors, (img_h, img_w))
        sc_err = float(jnp.max(jnp.abs(sc_k - sc_r)))
        pr_err = float(jnp.max(jnp.abs(pr_k - pr_r)))
        assert sc_err < 5e-2, f"score mismatch {sc_err}"
        assert pr_err < 2.5, f"proposal mismatch {pr_err}"

    proposals = rpn_head_forward([feat0, feat1], x, packed,
                                 [anchors0, anchors1], cfg, num_anchors)
    jax.block_until_ready(proposals)
    assert proposals.shape == (B, cfg["max_num"], 4)
    assert bool(jnp.all(jnp.isfinite(proposals)))
    print("KERNEL_OK")
</pallas_src>

<mosaic_0001>
module attributes {stable_mosaic.version = 11 : i64} {
  func.func @kernel(%arg0: i32, %arg1: memref<256x128xbf16, #tpu.memory_space<vmem>>, %arg2: memref<128x128xbf16, #tpu.memory_space<vmem>>, %arg3: memref<1x128xf32, #tpu.memory_space<vmem>>, %arg4: memref<128x128xbf16, #tpu.memory_space<vmem>>, %arg5: memref<1x128xf32, #tpu.memory_space<vmem>>, %arg6: memref<256x12xf32, #tpu.memory_space<vmem>>, %arg7: memref<256x3xf32, #tpu.memory_space<vmem>>, %arg8: memref<256x12xf32, #tpu.memory_space<vmem>>) attributes {dimension_semantics = [#tpu.dimension_semantics<parallel>], iteration_bounds = array<i64: 2>, scalar_prefetch = 0 : i64, scratch_operands = 0 : i64, tpu.core_type = #tpu.core_type<tc>, window_params = [{transform_indices = @transform_0, window_bounds = array<i64: 256, 128>}, {pipeline_mode = #tpu.pipeline_mode<synchronous>, transform_indices = @transform_1, window_bounds = array<i64: 128, 128>}, {pipeline_mode = #tpu.pipeline_mode<synchronous>, transform_indices = @transform_2, window_bounds = array<i64: 1, 128>}, {pipeline_mode = #tpu.pipeline_mode<synchronous>, transform_indices = @transform_3, window_bounds = array<i64: 128, 128>}, {pipeline_mode = #tpu.pipeline_mode<synchronous>, transform_indices = @transform_4, window_bounds = array<i64: 1, 128>}, {transform_indices = @transform_5, window_bounds = array<i64: 256, 12>}, {transform_indices = @transform_6, window_bounds = array<i64: 256, 3>}, {transform_indices = @transform_7, window_bounds = array<i64: 256, 12>}]} {
    %c0 = arith.constant 0 : index
    %c0_0 = arith.constant 0 : index
    %0 = vector.load %arg1[%c0, %c0_0] : memref<256x128xbf16, #tpu.memory_space<vmem>>, vector<256x128xbf16>
    %c0_1 = arith.constant 0 : index
    %c0_2 = arith.constant 0 : index
    %1 = vector.load %arg2[%c0_1, %c0_2] : memref<128x128xbf16, #tpu.memory_space<vmem>>, vector<128x128xbf16>
    %cst = arith.constant dense<0.000000e+00> : vector<256x128xf32>
    %2 = tpu.matmul %0, %1, %cst {dimension_numbers = #tpu.dot_dimension_numbers<[1], [0], [0], [1], [0, 0, 1, 1], [], []>} : vector<256x128xbf16>, vector<128x128xbf16>, vector<256x128xf32> -> vector<256x128xf32>
    %c0_3 = arith.constant 0 : index
    %c0_4 = arith.constant 0 : index
    %3 = vector.load %arg3[%c0_3, %c0_4] : memref<1x128xf32, #tpu.memory_space<vmem>>, vector<1x128xf32>
    %4 = vector.broadcast %3 : vector<1x128xf32> to vector<256x128xf32>
    %5 = arith.addf %2, %4 : vector<256x128xf32>
    %cst_5 = arith.constant 0.000000e+00 : f32
    %6 = vector.broadcast %cst_5 : f32 to vector<256x128xf32>
    %7 = arith.maximumf %5, %6 : vector<256x128xf32>
    %8 = arith.truncf %7 : vector<256x128xf32> to vector<256x128xbf16>
    %c0_6 = arith.constant 0 : index
    %c0_7 = arith.constant 0 : index
    %9 = vector.load %arg4[%c0_6, %c0_7] : memref<128x128xbf16, #tpu.memory_space<vmem>>, vector<128x128xbf16>
    %cst_8 = arith.constant dense<0.000000e+00> : vector<256x128xf32>
    %10 = tpu.matmul %8, %9, %cst_8 {dimension_numbers = #tpu.dot_dimension_numbers<[1], [0], [0], [1], [0, 0, 1, 1], [], []>} : vector<256x128xbf16>, vector<128x128xbf16>, vector<256x128xf32> -> vector<256x128xf32>
    %c0_9 = arith.constant 0 : index
    %c0_10 = arith.constant 0 : index
    %11 = vector.load %arg5[%c0_9, %c0_10] : memref<1x128xf32, #tpu.memory_space<vmem>>, vector<1x128xf32>
    %12 = vector.broadcast %11 : vector<1x128xf32> to vector<256x128xf32>
    %13 = arith.addf %10, %12 : vector<256x128xf32>
    %14 = vector.extract_strided_slice %13 {offsets = [0, 0], sizes = [256, 3], strides = [1, 1]} : vector<256x128xf32> to vector<256x3xf32>
    %15 = arith.negf %14 : vector<256x3xf32>
    %16 = math.exp %15 : vector<256x3xf32>
    %cst_11 = arith.constant 1.000000e+00 : f32
    %17 = vector.broadcast %cst_11 : f32 to vector<256x3xf32>
    %18 = arith.addf %17, %16 : vector<256x3xf32>
    %19 = arith.divf %17, %18 : vector<256x3xf32>
    %c0_12 = arith.constant 0 : index
    %c0_13 = arith.constant 0 : index
    %20 = vector.load %arg7[%c0_12, %c0_13] : memref<256x3xf32, #tpu.memory_space<vmem>>, vector<256x3xf32>
    tpu.vector_store %arg7[%c0_12, %c0_13], %19 {strides = array<i32>} : memref<256x3xf32, #tpu.memory_space<vmem>>, vector<256x3xf32>,
    %21 = vector.extract_strided_slice %13 {offsets = [0, 3], sizes = [256, 3], strides = [1, 1]} : vector<256x128xf32> to vector<256x3xf32>
    %cst_14 = arith.constant 1.000000e+00 : f32
    %22 = vector.broadcast %cst_14 : f32 to vector<256x3xf32>
    %23 = arith.mulf %21, %22 : vector<256x3xf32>
    %cst_15 = arith.constant 0.000000e+00 : f32
    %24 = vector.broadcast %cst_15 : f32 to vector<256x3xf32>
    %25 = arith.addf %23, %24 : vector<256x3xf32>
    %26 = vector.extract_strided_slice %13 {offsets = [0, 6], sizes = [256, 3], strides = [1, 1]} : vector<256x128xf32> to vector<256x3xf32>
    %cst_16 = arith.constant 1.000000e+00 : f32
    %27 = vector.broadcast %cst_16 : f32 to vector<256x3xf32>
    %28 = arith.mulf %26, %27 : vector<256x3xf32>
    %cst_17 = arith.constant 0.000000e+00 : f32
    %29 = vector.broadcast %cst_17 : f32 to vector<256x3xf32>
    %30 = arith.addf %28, %29 : vector<256x3xf32>
    %31 = vector.extract_strided_slice %13 {offsets = [0, 9], sizes = [256, 3], strides = [1, 1]} : vector<256x128xf32> to vector<256x3xf32>
    %cst_18 = arith.constant 1.000000e+00 : f32
    %32 = vector.broadcast %cst_18 : f32 to vector<256x3xf32>
    %33 = arith.mulf %31, %32 : vector<256x3xf32>
    %cst_19 = arith.constant 0.000000e+00 : f32
    %34 = vector.broadcast %cst_19 : f32 to vector<256x3xf32>
    %35 = arith.addf %33, %34 : vector<256x3xf32>
    %cst_20 = arith.constant -4.13516665 : f32
    %cst_21 = arith.constant 4.13516665 : f32
    %36 = vector.broadcast %cst_20 : f32 to vector<256x3xf32>
    %37 = arith.maximumf %36, %35 : vector<256x3xf32>
    %38 = vector.broadcast %cst_21 : f32 to vector<256x3xf32>
    %39 = arith.minimumf %38, %37 : vector<256x3xf32>
    %40 = vector.extract_strided_slice %13 {offsets = [0, 12], sizes = [256, 3], strides = [1, 1]} : vector<256x128xf32> to vector<256x3xf32>
    %cst_22 = arith.constant 1.000000e+00 : f32
    %41 = vector.broadcast %cst_22 : f32 to vector<256x3xf32>
    %42 = arith.mulf %40, %41 : vector<256x3xf32>
    %cst_23 = arith.constant 0.000000e+00 : f32
    %43 = vector.broadcast %cst_23 : f32 to vector<256x3xf32>
    %44 = arith.addf %42, %43 : vector<256x3xf32>
    %cst_24 = arith.constant -4.13516665 : f32
    %cst_25 = arith.constant 4.13516665 : f32
    %45 = vector.broadcast %cst_24 : f32 to vector<256x3xf32>
    %46 = arith.maximumf %45, %44 : vector<256x3xf32>
    %47 = vector.broadcast %cst_25 : f32 to vector<256x3xf32>
    %48 = arith.minimumf %47, %46 : vector<256x3xf32>
    %c0_26 = arith.constant 0 : index
    %c0_27 = arith.constant 0 : index
    %49 = vector.load %arg6[%c0_26, %c0_27] : memref<256x12xf32, #tpu.memory_space<vmem>>, vector<256x3xf32>
    %c0_28 = arith.constant 0 : index
    %c3 = arith.constant 3 : index
    %50 = vector.load %arg6[%c0_28, %c3] : memref<256x12xf32, #tpu.memory_space<vmem>>, vector<256x3xf32>
    %c0_29 = arith.constant 0 : index
    %c6 = arith.constant 6 : index
    %51 = vector.load %arg6[%c0_29, %c6] : memref<256x12xf32, #tpu.memory_space<vmem>>, vector<256x3xf32>
    %c0_30 = arith.constant 0 : index
    %c9 = arith.constant 9 : index
    %52 = vector.load %arg6[%c0_30, %c9] : memref<256x12xf32, #tpu.memory_space<vmem>>, vector<256x3xf32>
    %53 = arith.subf %51, %49 : vector<256x3xf32>
    %54 = arith.subf %52, %50 : vector<256x3xf32>
    %55 = arith.addf %49, %51 : vector<256x3xf32>
    %cst_31 = arith.constant 5.000000e-01 : f32
    %56 = vector.broadcast %cst_31 : f32 to vector<256x3xf32>
    %57 = arith.mulf %55, %56 : vector<256x3xf32>
    %58 = arith.addf %50, %52 : vector<256x3xf32>
    %cst_32 = arith.constant 5.000000e-01 : f32
    %59 = vector.broadcast %cst_32 : f32 to vector<256x3xf32>
    %60 = arith.mulf %58, %59 : vector<256x3xf32>
    %61 = math.exp %39 : vector<256x3xf32>
    %62 = arith.mulf %53, %61 : vector<256x3xf32>
    %63 = math.exp %48 : vector<256x3xf32>
    %64 = arith.mulf %54, %63 : vector<256x3xf32>
    %65 = arith.mulf %53, %25 : vector<256x3xf32>
    %66 = arith.addf %57, %65 : vector<256x3xf32>
    %67 = arith.mulf %54, %30 : vector<256x3xf32>
    %68 = arith.addf %60, %67 : vector<256x3xf32>
    %cst_33 = arith.constant 5.000000e-01 : f32
    %69 = vector.broadcast %cst_33 : f32 to vector<256x3xf32>
    %70 = arith.mulf %62, %69 : vector<256x3xf32>
    %71 = arith.subf %66, %70 : vector<256x3xf32>
    %cst_34 = arith.constant 0.000000e+00 : f32
    %cst_35 = arith.constant 6.400000e+01 : f32
    %72 = vector.broadcast %cst_34 : f32 to vector<256x3xf32>
    %73 = arith.maximumf %72, %71 : vector<256x3xf32>
    %74 = vector.broadcast %cst_35 : f32 to vector<256x3xf32>
    %75 = arith.minimumf %74, %73 : vector<256x3xf32>
    %c0_36 = arith.constant 0 : index
    %c0_37 = arith.constant 0 : index
    %76 = vector.load %arg8[%c0_36, %c0_37] : memref<256x12xf32, #tpu.memory_space<vmem>>, vector<256x3xf32>
    tpu.vector_store %arg8[%c0_36, %c0_37], %75 {strides = array<i32>} : memref<256x12xf32, #tpu.memory_space<vmem>>, vector<256x3xf32>,
    %cst_38 = arith.constant 5.000000e-01 : f32
    %77 = vector.broadcast %cst_38 : f32 to vector<256x3xf32>
    %78 = arith.mulf %64, %77 : vector<256x3xf32>
    %79 = arith.subf %68, %78 : vector<256x3xf32>
    %cst_39 = arith.constant 0.000000e+00 : f32
    %cst_40 = arith.constant 6.400000e+01 : f32
    %80 = vector.broadcast %cst_39 : f32 to vector<256x3xf32>
    %81 = arith.maximumf %80, %79 : vector<256x3xf32>
    %82 = vector.broadcast %cst_40 : f32 to vector<256x3xf32>
    %83 = arith.minimumf %82, %81 : vector<256x3xf32>
    %c0_41 = arith.constant 0 : index
    %c3_42 = arith.constant 3 : index
    %84 = vector.load %arg8[%c0_41, %c3_42] : memref<256x12xf32, #tpu.memory_space<vmem>>, vector<256x3xf32>
    tpu.vector_store %arg8[%c0_41, %c3_42], %83 {strides = array<i32>} : memref<256x12xf32, #tpu.memory_space<vmem>>, vector<256x3xf32>,
    %cst_43 = arith.constant 5.000000e-01 : f32
    %85 = vector.broadcast %cst_43 : f32 to vector<256x3xf32>
    %86 = arith.mulf %62, %85 : vector<256x3xf32>
    %87 = arith.addf %66, %86 : vector<256x3xf32>
    %cst_44 = arith.constant 0.000000e+00 : f32
    %cst_45 = arith.constant 6.400000e+01 : f32
    %88 = vector.broadcast %cst_44 : f32 to vector<256x3xf32>
    %89 = arith.maximumf %88, %87 : vector<256x3xf32>
    %90 = vector.broadcast %cst_45 : f32 to vector<256x3xf32>
    %91 = arith.minimumf %90, %89 : vector<256x3xf32>
    %c0_46 = arith.constant 0 : index
    %c6_47 = arith.constant 6 : index
    %92 = vector.load %arg8[%c0_46, %c6_47] : memref<256x12xf32, #tpu.memory_space<vmem>>, vector<256x3xf32>
    tpu.vector_store %arg8[%c0_46, %c6_47], %91 {strides = array<i32>} : memref<256x12xf32, #tpu.memory_space<vmem>>, vector<256x3xf32>,
    %cst_48 = arith.constant 5.000000e-01 : f32
    %93 = vector.broadcast %cst_48 : f32 to vector<256x3xf32>
    %94 = arith.mulf %64, %93 : vector<256x3xf32>
    %95 = arith.addf %68, %94 : vector<256x3xf32>
    %cst_49 = arith.constant 0.000000e+00 : f32
    %cst_50 = arith.constant 6.400000e+01 : f32
    %96 = vector.broadcast %cst_49 : f32 to vector<256x3xf32>
    %97 = arith.maximumf %96, %95 : vector<256x3xf32>
    %98 = vector.broadcast %cst_50 : f32 to vector<256x3xf32>
    %99 = arith.minimumf %98, %97 : vector<256x3xf32>
    %c0_51 = arith.constant 0 : index
    %c9_52 = arith.constant 9 : index
    %100 = vector.load %arg8[%c0_51, %c9_52] : memref<256x12xf32, #tpu.memory_space<vmem>>, vector<256x3xf32>
    tpu.vector_store %arg8[%c0_51, %c9_52], %99 {strides = array<i32>} : memref<256x12xf32, #tpu.memory_space<vmem>>, vector<256x3xf32>,
    return
  }
  func.func @transform_0(%arg0: i32) -> (i32, i32) {
    %c0_i32 = arith.constant 0 : i32
    %c0_i32_0 = arith.constant 0 : i32
    return %arg0, %c0_i32 : i32, i32
  }
  func.func @transform_1(%arg0: i32) -> (i32, i32) {
    %c0_i32 = arith.constant 0 : i32
    %c0_i32_0 = arith.constant 0 : i32
    %c0_i32_1 = arith.constant 0 : i32
    return %c0_i32, %c0_i32_0 : i32, i32
  }
  func.func @transform_2(%arg0: i32) -> (i32, i32) {
    %c0_i32 = arith.constant 0 : i32
    %c0_i32_0 = arith.constant 0 : i32
    %c0_i32_1 = arith.constant 0 : i32
    return %c0_i32, %c0_i32_0 : i32, i32
  }
  func.func @transform_3(%arg0: i32) -> (i32, i32) {
    %c0_i32 = arith.constant 0 : i32
    %c0_i32_0 = arith.constant 0 : i32
    %c0_i32_1 = arith.constant 0 : i32
    return %c0_i32, %c0_i32_0 : i32, i32
  }
  func.func @transform_4(%arg0: i32) -> (i32, i32) {
    %c0_i32 = arith.constant 0 : i32
    %c0_i32_0 = arith.constant 0 : i32
    %c0_i32_1 = arith.constant 0 : i32
    return %c0_i32, %c0_i32_0 : i32, i32
  }
  func.func @transform_5(%arg0: i32) -> (i32, i32) {
    %c0_i32 = arith.constant 0 : i32
    %c0_i32_0 = arith.constant 0 : i32
    return %arg0, %c0_i32 : i32, i32
  }
  func.func @transform_6(%arg0: i32) -> (i32, i32) {
    %c0_i32 = arith.constant 0 : i32
    %c0_i32_0 = arith.constant 0 : i32
    return %arg0, %c0_i32 : i32, i32
  }
  func.func @transform_7(%arg0: i32) -> (i32, i32) {
    %c0_i32 = arith.constant 0 : i32
    %c0_i32_0 = arith.constant 0 : i32
    return %arg0, %c0_i32 : i32, i32
  }
}

</mosaic_0001>

<llo_original>
// kernel: tpu_custom_call.1
$region0: #{tpu_custom_call.1}
  #allocation0 [shape = 'u32[]', space=smem, size = 0x4, offset = 0x4, fixed_abs, tag = 'smem constant byte address 0x4 - core index']
  #allocation1 [shape = 'u32[72,128]{1,0:T(1,128)}', space=vmem, size = 0x9000, scoped, tag = 'internal scratch']
  %s0 = inlined_call_operand.vmem [shape: bf16[512,128], index: 0, kind: input, shape index: {}]
  %s1 = inlined_call_operand.vmem [shape: bf16[128,128], index: 1, kind: input, shape index: {}]
  %s2 = inlined_call_operand.vmem [shape: f32[1,128], index: 2, kind: input, shape index: {}]
  %s3 = inlined_call_operand.vmem [shape: bf16[128,128], index: 3, kind: input, shape index: {}]
  %s4 = inlined_call_operand.vmem [shape: f32[1,128], index: 4, kind: input, shape index: {}]
  %s5 = inlined_call_operand.vmem [shape: f32[512,12], index: 5, kind: input, shape index: {}]
  %s6 = inlined_call_operand.vmem [shape: f32[512,3], index: 6, kind: output, shape index: {0}]
  %s7 = inlined_call_operand.vmem [shape: f32[512,12], index: 7, kind: output, shape index: {1}]
  %8 = xla_tuple %s6, %s7
  %s9 = sld [smem:[#allocation0]]
  $region65: #{tpu_custom_call.1} parent=0
    _
  %s11 = ssub.s32 1, %s9
  %s12 = scalar_select 0, %s11, %s9
  loop: start=0, step=1, limit=4
  $region2: #{tpu_custom_call.1} parent=0 // loop_pre_header
    _
  $region3: #{tpu_custom_call.1} parent=0 // loop_header
    %s14 = sphi 0, %s18
    %p15 = scmp.ge.s32.totalorder %s14, 4
    %s24 = sphi 0, %s26
    %s27 = sphi 0, %s24
    %s28 = sphi 0, %s27
    %s44 = sphi 0, %s28
    %s48 = sphi 0, %s48
    %s50 = sphi 0, %s48
    %s51 = sphi 0, %s50
    %s65 = sphi 0, %s51
    %s69 = sphi 0, %s69
    %s71 = sphi 0, %s69
    %s72 = sphi 0, %s71
    %s86 = sphi 0, %s72
    %s90 = sphi 0, %s90
    %s92 = sphi 0, %s90
    %s93 = sphi 0, %s92
    %s107 = sphi 0, %s93
    %s111 = sphi 0, %s111
    %s113 = sphi 0, %s111
    %s114 = sphi 0, %s113
    %s128 = sphi 0, %s114
    %s134 = sphi 0, %s136
    %s137 = sphi 0, %s134
    %s138 = sphi 0, %s137
    %s154 = sphi 0, %s138
    %s160 = sphi 0, %s162
    %s163 = sphi 0, %s160
    %s164 = sphi 0, %s163
    %s180 = sphi 0, %s164
    %s186 = sphi 0, %s188
    %s189 = sphi 0, %s186
    %s190 = sphi 0, %s189
    %s206 = sphi 0, %s190
  $region4: #{tpu_custom_call.1} parent=0 // loop_header_branch
    %17 = sbr.rel (%p15) target = $region8
  $region5: #{tpu_custom_call.1} parent=0 // loop_body
    %s19 = ssub.s32 %s14, 1
    %s20 = ssub.s32 %s14, 2
    %s21 = sadd.s32 %s14, 1
    %s22 = ssub.s32 %s14, %s21
    %p23 = scmp.eq.s32.totalorder %s22, 0
    %s25 = sadd.s32 %s24, 1
    %s26 = scalar_select %p23, %s24, %s25
    %p29 = pneg %p23
    %p30 = scmp.eq.s32.totalorder %s14, 1
    %p31 = por %p29, %p30
    %p32 = scmp.ne.s32.totalorder %s24, %s27
    %p33 = scmp.eq.s32.totalorder %s14, 0
    %p34 = por %p32, %p33
    %p35 = scmp.ne.s32.totalorder %s24, %s27
    %p36 = scmp.eq.s32.totalorder %s19, 1
    %p37 = por %p35, %p36
    %p38 = scmp.ne.s32.totalorder %s27, %s28
    %p39 = scmp.eq.s32.totalorder %s19, 0
    %p40 = por %p38, %p39
    %p41 = scmp.ne.s32.totalorder %s27, %s28
    %p42 = scmp.eq.s32.totalorder %s20, 1
    %p43 = por %p41, %p42
    %p45 = scmp.ne.s32.totalorder %s28, %s44
    %p46 = scmp.eq.s32.totalorder %s20, 0
    %p47 = por %p45, %p46
    %s49 = sadd.s32 %s48, 1
    %p52 = scmp.eq.s32.totalorder %s14, 1
    %p53 = scmp.ne.s32.totalorder %s48, %s50
    %p54 = scmp.eq.s32.totalorder %s14, 0
    %p55 = por %p53, %p54
    %p56 = scmp.ne.s32.totalorder %s48, %s50
    %p57 = scmp.eq.s32.totalorder %s19, 1
    %p58 = por %p56, %p57
    %p59 = scmp.ne.s32.totalorder %s50, %s51
    %p60 = scmp.eq.s32.totalorder %s19, 0
    %p61 = por %p59, %p60
    %p62 = scmp.ne.s32.totalorder %s50, %s51
    %p63 = scmp.eq.s32.totalorder %s20, 1
    %p64 = por %p62, %p63
    %p66 = scmp.ne.s32.totalorder %s51, %s65
    %p67 = scmp.eq.s32.totalorder %s20, 0
    %p68 = por %p66, %p67
    %s70 = sadd.s32 %s69, 1
    %p73 = scmp.eq.s32.totalorder %s14, 1
    %p74 = scmp.ne.s32.totalorder %s69, %s71
    %p75 = scmp.eq.s32.totalorder %s14, 0
    %p76 = por %p74, %p75
    %p77 = scmp.ne.s32.totalorder %s69, %s71
    %p78 = scmp.eq.s32.totalorder %s19, 1
    %p79 = por %p77, %p78
    %p80 = scmp.ne.s32.totalorder %s71, %s72
    %p81 = scmp.eq.s32.totalorder %s19, 0
    %p82 = por %p80, %p81
    %p83 = scmp.ne.s32.totalorder %s71, %s72
    %p84 = scmp.eq.s32.totalorder %s20, 1
    %p85 = por %p83, %p84
    %p87 = scmp.ne.s32.totalorder %s72, %s86
    %p88 = scmp.eq.s32.totalorder %s20, 0
    %p89 = por %p87, %p88
    %s91 = sadd.s32 %s90, 1
    %p94 = scmp.eq.s32.totalorder %s14, 1
    %p95 = scmp.ne.s32.totalorder %s90, %s92
    %p96 = scmp.eq.s32.totalorder %s14, 0
    %p97 = por %p95, %p96
    %p98 = scmp.ne.s32.totalorder %s90, %s92
    %p99 = scmp.eq.s32.totalorder %s19, 1
    %p100 = por %p98, %p99
    %p101 = scmp.ne.s32.totalorder %s92, %s93
    %p102 = scmp.eq.s32.totalorder %s19, 0
    %p103 = por %p101, %p102
    %p104 = scmp.ne.s32.totalorder %s92, %s93
    %p105 = scmp.eq.s32.totalorder %s20, 1
    %p106 = por %p104, %p105
    %p108 = scmp.ne.s32.totalorder %s93, %s107
    %p109 = scmp.eq.s32.totalorder %s20, 0
    %p110 = por %p108, %p109
    %s112 = sadd.s32 %s111, 1
    %p115 = scmp.eq.s32.totalorder %s14, 1
    %p116 = scmp.ne.s32.totalorder %s111, %s113
    %p117 = scmp.eq.s32.totalorder %s14, 0
    %p118 = por %p116, %p117
    %p119 = scmp.ne.s32.totalorder %s111, %s113
    %p120 = scmp.eq.s32.totalorder %s19, 1
    %p121 = por %p119, %p120
    %p122 = scmp.ne.s32.totalorder %s113, %s114
    %p123 = scmp.eq.s32.totalorder %s19, 0
    %p124 = por %p122, %p123
    %p125 = scmp.ne.s32.totalorder %s113, %s114
    %p126 = scmp.eq.s32.totalorder %s20, 1
    %p127 = por %p125, %p126
    %p129 = scmp.ne.s32.totalorder %s114, %s128
    %p130 = scmp.eq.s32.totalorder %s20, 0
    %p131 = por %p129, %p130
    %s132 = ssub.s32 %s14, %s21
    %p133 = scmp.eq.s32.totalorder %s132, 0
    %s135 = sadd.s32 %s134, 1
    %s136 = scalar_select %p133, %s134, %s135
    %p139 = pneg %p133
    %p140 = scmp.eq.s32.totalorder %s14, 1
    %p141 = por %p139, %p140
    %p142 = scmp.ne.s32.totalorder %s134, %s137
    %p143 = scmp.eq.s32.totalorder %s14, 0
    %p144 = por %p142, %p143
    %p145 = scmp.ne.s32.totalorder %s134, %s137
    %p146 = scmp.eq.s32.totalorder %s19, 1
    %p147 = por %p145, %p146
    %p148 = scmp.ne.s32.totalorder %s137, %s138
    %p149 = scmp.eq.s32.totalorder %s19, 0
    %p150 = por %p148, %p149
    %p151 = scmp.ne.s32.totalorder %s137, %s138
    %p152 = scmp.eq.s32.totalorder %s20, 1
    %p153 = por %p151, %p152
    %p155 = scmp.ne.s32.totalorder %s138, %s154
    %p156 = scmp.eq.s32.totalorder %s20, 0
    %p157 = por %p155, %p156
    %s158 = ssub.s32 %s14, %s21
    %p159 = scmp.eq.s32.totalorder %s158, 0
    %s161 = sadd.s32 %s160, 1
    %s162 = scalar_select %p159, %s160, %s161
    %p165 = pneg %p159
    %p166 = scmp.eq.s32.totalorder %s14, 1
    %p167 = por %p165, %p166
    %p168 = scmp.ne.s32.totalorder %s160, %s163
    %p169 = scmp.eq.s32.totalorder %s14, 0
    %p170 = por %p168, %p169
    %p171 = scmp.ne.s32.totalorder %s160, %s163
    %p172 = scmp.eq.s32.totalorder %s19, 1
    %p173 = por %p171, %p172
    %p174 = scmp.ne.s32.totalorder %s163, %s164
    %p175 = scmp.eq.s32.totalorder %s19, 0
    %p176 = por %p174, %p175
    %p177 = scmp.ne.s32.totalorder %s163, %s164
    %p178 = scmp.eq.s32.totalorder %s20, 1
    %p179 = por %p177, %p178
    %p181 = scmp.ne.s32.totalorder %s164, %s180
    %p182 = scmp.eq.s32.totalorder %s20, 0
    %p183 = por %p181, %p182
    %s184 = ssub.s32 %s14, %s21
    %p185 = scmp.eq.s32.totalorder %s184, 0
    %s187 = sadd.s32 %s186, 1
    %s188 = scalar_select %p185, %s186, %s187
    %p191 = pneg %p185
    %p192 = scmp.eq.s32.totalorder %s14, 1
    %p193 = por %p191, %p192
    %p194 = scmp.ne.s32.totalorder %s186, %s189
    %p195 = scmp.eq.s32.totalorder %s14, 0
    %p196 = por %p194, %p195
    %p197 = scmp.ne.s32.totalorder %s186, %s189
    %p198 = scmp.eq.s32.totalorder %s19, 1
    %p199 = por %p197, %p198
    %p200 = scmp.ne.s32.totalorder %s189, %s190
    %p201 = scmp.eq.s32.totalorder %s19, 0
    %p202 = por %p200, %p201
    %p203 = scmp.ne.s32.totalorder %s189, %s190
    %p204 = scmp.eq.s32.totalorder %s20, 1
    %p205 = por %p203, %p204
    %p207 = scmp.ne.s32.totalorder %s190, %s206
    %p208 = scmp.eq.s32.totalorder %s20, 0
    %p209 = por %p207, %p208
    %p210 = scmp.le.s32.totalorder 1, %s14
    %p211 = scmp.lt.s32.totalorder %s14, 3
    %p212 = pnand %p210, %p211
    %p213 = pneg %p212
    // Predicated region
    $region9: #{tpu_custom_call.1} parent=5 // pred_check
      _
    $region10: #{tpu_custom_call.1} parent=5 // pred_check_branch
      %215 = sbr.rel (%p212) target = $region12
    $region11: #{tpu_custom_call.1} parent=5 // pred_region
      %s216 = ssub.s32 %s14, 1
      // Predicated region
      $region13: #{tpu_custom_call.1} parent=11 // pred_check
        %p217 = pneg %p61
      $region14: #{tpu_custom_call.1} parent=11 // pred_check_branch
        %219 = sbr.rel (%p217) target = $region16
      $region15: #{tpu_custom_call.1} parent=11 // pred_region
        _
      $region16: #{tpu_custom_call.1} parent=11 // pred_fallthru
        _
      // Predicated region
      $region17: #{tpu_custom_call.1} parent=11 // pred_check
        %p220 = pneg %p82
      $region18: #{tpu_custom_call.1} parent=11 // pred_check_branch
        %222 = sbr.rel (%p220) target = $region20
      $region19: #{tpu_custom_call.1} parent=11 // pred_region
        _
      $region20: #{tpu_custom_call.1} parent=11 // pred_fallthru
        _
      // Predicated region
      $region21: #{tpu_custom_call.1} parent=11 // pred_check
        %p223 = pneg %p103
      $region22: #{tpu_custom_call.1} parent=11 // pred_check_branch
        %225 = sbr.rel (%p223) target = $region24
      $region23: #{tpu_custom_call.1} parent=11 // pred_region
        _
      $region24: #{tpu_custom_call.1} parent=11 // pred_fallthru
        _
      // Predicated region
      $region25: #{tpu_custom_call.1} parent=11 // pred_check
        %p226 = pneg %p124
      $region26: #{tpu_custom_call.1} parent=11 // pred_check_branch
        %228 = sbr.rel (%p226) target = $region28
      $region27: #{tpu_custom_call.1} parent=11 // pred_region
        _
      $region28: #{tpu_custom_call.1} parent=11 // pred_fallthru
        _
    $region12: #{tpu_custom_call.1} parent=5 // pred_fallthru
      _
    %p229 = scmp.lt.s32.totalorder %s14, 2
    // Predicated region
    $region29: #{tpu_custom_call.1} parent=5 // pred_check
      %p230 = pneg %p229
    $region30: #{tpu_custom_call.1} parent=5 // pred_check_branch
      %232 = sbr.rel (%p230) target = $region32
    $region31: #{tpu_custom_call.1} parent=5 // pred_region
      // Predicated region
      $region33: #{tpu_custom_call.1} parent=31 // pred_check
        %p233 = pneg %p34
      $region34: #{tpu_custom_call.1} parent=31 // pred_check_branch
        %235 = sbr.rel (%p233) target = $region36
      $region35: #{tpu_custom_call.1} parent=31 // pred_region
        %s236 = smul.u32 32, %s14
        %p237 = scmp.lt.s32.totalorder %s236, 63
        %s238 = scalar_select %p237, %s236, 63
        %s239 = smul.addr %s238, 4
        %s240 = scalar_lea.vmem %s0, %s239
        %s241 = smul.u32 32, %s14
      $region36: #{tpu_custom_call.1} parent=31 // pred_fallthru
        _
      // Predicated region
      $region37: #{tpu_custom_call.1} parent=31 // pred_check
        %p242 = pneg %p144
      $region38: #{tpu_custom_call.1} parent=31 // pred_check_branch
        %244 = sbr.rel (%p242) target = $region40
      $region39: #{tpu_custom_call.1} parent=31 // pred_region
        %s245 = smul.u32 32, %s14
        %p246 = scmp.lt.s32.totalorder %s245, 63
        %s247 = scalar_select %p246, %s245, 63
        %s248 = smul.addr %s247, 8
        %s249 = scalar_lea.vmem %s5, %s248
        %s250 = smul.u32 32, %s14
      $region40: #{tpu_custom_call.1} parent=31 // pred_fallthru
        _
    $region32: #{tpu_custom_call.1} parent=5 // pred_fallthru
      _
    %p251 = scmp.le.s32.totalorder 1, %s14
    %p252 = scmp.lt.s32.totalorder %s14, 3
    %p253 = pnand %p251, %p252
    %p254 = pneg %p253
    // Predicated region
    $region41: #{tpu_custom_call.1} parent=5 // pred_check
      _
    $region42: #{tpu_custom_call.1} parent=5 // pred_check_branch
      %256 = sbr.rel (%p253) target = $region44
    $region43: #{tpu_custom_call.1} parent=5 // pred_region
      %s257 = ssub.s32 %s14, 1
      %s258 = smul.u32 32, %s19
      %p259 = scmp.lt.s32.totalorder %s258, 63
      %s260 = scalar_select %p259, %s258, 63
      %s261 = smul.addr %s260, 4
      %s262 = scalar_lea.vmem %s0, %s261
      %p263 = pneg %p40
      %p264 = pneg %p37
      %p265 = pneg %p61
      %p266 = pneg %p58
      %p267 = pneg %p82
      %p268 = pneg %p79
      %p269 = pneg %p103
      %p270 = pneg %p100
      %p271 = pneg %p124
      %p272 = pneg %p121
      %s273 = smul.u32 32, %s19
      %p274 = scmp.lt.s32.totalorder %s273, 63
      %s275 = scalar_select %p274, %s273, 63
      %s276 = smul.addr %s275, 8
      %s277 = scalar_lea.vmem %s5, %s276
      %p278 = pneg %p150
      %p279 = pneg %p147
      %p280 = pneg %p176
      %p281 = pneg %p173
      %s282 = smul.u32 32, %s19
      %p283 = scmp.lt.s32.totalorder %s282, 63
      %s284 = scalar_select %p283, %s282, 63
      %s285 = smul.addr %s284, 8
      %s286 = scalar_lea.vmem %s6, %s285
      %p287 = pneg %p202
      %p288 = pneg %p199
      %s289 = smul.u32 32, %s19
      %p290 = scmp.lt.s32.totalorder %s289, 63
      %s291 = scalar_select %p290, %s289, 63
      %s292 = smul.addr %s291, 8
      %s293 = scalar_lea.vmem %s7, %s292
      %s294 = smul.u32 32, %s19
      %p295 = scmp.lt.s32.totalorder %s294, 63
      %s296 = scalar_select %p295, %s294, 63
      %s297 = smul.addr %s296, 4
      %s298 = scalar_lea.vmem %s0, %s297
      %s299 = smul.u32 32, %s19
      %s300 = smul.u32 32, %s19
      %p301 = scmp.lt.s32.totalorder %s300, 63
      %s302 = scalar_select %p301, %s300, 63
      %s303 = smul.addr %s302, 8
      %s304 = scalar_lea.vmem %s5, %s303
      %s305 = smul.u32 32, %s19
      %s306 = smul.u32 32, %s19
      %p307 = scmp.lt.s32.totalorder %s306, 63
      %s308 = scalar_select %p307, %s306, 63
      %s309 = smul.addr %s308, 8
      %s310 = scalar_lea.vmem %s6, %s309
      %s311 = smul.u32 32, %s19
      %s312 = smul.u32 32, %s19
      %p313 = scmp.lt.s32.totalorder %s312, 63
      %s314 = scalar_select %p313, %s312, 63
      %s315 = smul.addr %s314, 8
      %s316 = scalar_lea.vmem %s7, %s315
      %s317 = smul.u32 32, %s19
      %v318 = vld [vmem:[%s298] sm:$0xf]
      %v319 = vld [vmem:[%s298 + $0x4] sm:$0xf]
      %v320 = vld [vmem:[%s298 + $0x8] sm:$0xf]
      %v321 = vld [vmem:[%s298 + $0xc] sm:$0xf]
      %v322 = vld [vmem:[%s298 + $0x10] sm:$0xf]
      %v323 = vld [vmem:[%s298 + $0x14] sm:$0xf]
      %v324 = vld [vmem:[%s298 + $0x18] sm:$0xf]
      %v325 = vld [vmem:[%s298 + $0x1c] sm:$0xf]
      %v326 = vld [vmem:[%s298 + $0x20] sm:$0xf]
      %v327 = vld [vmem:[%s298 + $0x24] sm:$0xf]
      %v328 = vld [vmem:[%s298 + $0x28] sm:$0xf]
      %v329 = vld [vmem:[%s298 + $0x2c] sm:$0xf]
      %v330 = vld [vmem:[%s298 + $0x30] sm:$0xf]
      %v331 = vld [vmem:[%s298 + $0x34] sm:$0xf]
      %v332 = vld [vmem:[%s298 + $0x38] sm:$0xf]
      %v333 = vld [vmem:[%s298 + $0x3c] sm:$0xf]
      %v334 = vld [vmem:[%s298 + $0x40] sm:$0xf]
      %v335 = vld [vmem:[%s298 + $0x44] sm:$0xf]
      %v336 = vld [vmem:[%s298 + $0x48] sm:$0xf]
      %v337 = vld [vmem:[%s298 + $0x4c] sm:$0xf]
      %v338 = vld [vmem:[%s298 + $0x50] sm:$0xf]
      %v339 = vld [vmem:[%s298 + $0x54] sm:$0xf]
      %v340 = vld [vmem:[%s298 + $0x58] sm:$0xf]
      %v341 = vld [vmem:[%s298 + $0x5c] sm:$0xf]
      %v342 = vld [vmem:[%s298 + $0x60] sm:$0xf]
      %v343 = vld [vmem:[%s298 + $0x64] sm:$0xf]
      %v344 = vld [vmem:[%s298 + $0x68] sm:$0xf]
      %v345 = vld [vmem:[%s298 + $0x6c] sm:$0xf]
      %v346 = vld [vmem:[%s298 + $0x70] sm:$0xf]
      %v347 = vld [vmem:[%s298 + $0x74] sm:$0xf]
      %v348 = vld [vmem:[%s298 + $0x78] sm:$0xf]
      %v349 = vld [vmem:[%s298 + $0x7c] sm:$0xf]
      %v350 = vld [vmem:[%s1] sm:$0xf]
      %v351 = vld [vmem:[%s1 + $0x4] sm:$0xf]
      %v352 = vld [vmem:[%s1 + $0x8] sm:$0xf]
      %v353 = vld [vmem:[%s1 + $0xc] sm:$0xf]
      %v354 = vld [vmem:[%s1 + $0x10] sm:$0xf]
      %v355 = vld [vmem:[%s1 + $0x14] sm:$0xf]
      %v356 = vld [vmem:[%s1 + $0x18] sm:$0xf]
      %v357 = vld [vmem:[%s1 + $0x1c] sm:$0xf]
      %v358 = vld [vmem:[%s1 + $0x20] sm:$0xf]
      %v359 = vld [vmem:[%s1 + $0x24] sm:$0xf]
      %v360 = vld [vmem:[%s1 + $0x28] sm:$0xf]
      %v361 = vld [vmem:[%s1 + $0x2c] sm:$0xf]
      %v362 = vld [vmem:[%s1 + $0x30] sm:$0xf]
      %v363 = vld [vmem:[%s1 + $0x34] sm:$0xf]
      %v364 = vld [vmem:[%s1 + $0x38] sm:$0xf]
      %v365 = vld [vmem:[%s1 + $0x3c] sm:$0xf]
      %v366 = vld [vmem:[%s2] sm:$0x1]
      %v368 = vperm.slane %v366, 0
      %v402 = vunpack.c.l.b16 %v318
      %v403 = vunpack.c.l.b16 %v319
      %v404 = vunpack.c.l.b16 %v320
      %v405 = vunpack.c.l.b16 %v321
      %v406 = vunpack.c.l.b16 %v322
      %v407 = vunpack.c.l.b16 %v323
      %v408 = vunpack.c.l.b16 %v324
      %v409 = vunpack.c.l.b16 %v325
      %v410 = vunpack.c.l.b16 %v326
      %v411 = vunpack.c.l.b16 %v327
      %v412 = vunpack.c.l.b16 %v328
      %v413 = vunpack.c.l.b16 %v329
      %v414 = vunpack.c.l.b16 %v330
      %v415 = vunpack.c.l.b16 %v331
      %v416 = vunpack.c.l.b16 %v332
      %v417 = vunpack.c.l.b16 %v333
      %v418 = vunpack.c.l.b16 %v334
      %v419 = vunpack.c.l.b16 %v335
      %v420 = vunpack.c.l.b16 %v336
      %v421 = vunpack.c.l.b16 %v337
      %v422 = vunpack.c.l.b16 %v338
      %v423 = vunpack.c.l.b16 %v339
      %v424 = vunpack.c.l.b16 %v340
      %v425 = vunpack.c.l.b16 %v341
      %v426 = vunpack.c.l.b16 %v342
      %v427 = vunpack.c.l.b16 %v343
      %v428 = vunpack.c.l.b16 %v344
      %v429 = vunpack.c.l.b16 %v345
      %v430 = vunpack.c.l.b16 %v346
      %v431 = vunpack.c.l.b16 %v347
      %v432 = vunpack.c.l.b16 %v348
      %v433 = vunpack.c.l.b16 %v349
      %v434 = vpack.c.b16 %v403, %v402
      %v435 = vpack.c.b16 %v405, %v404
      %v436 = vpack.c.b16 %v407, %v406
      %v437 = vpack.c.b16 %v409, %v408
      %v438 = vpack.c.b16 %v411, %v410
      %v439 = vpack.c.b16 %v413, %v412
      %v440 = vpack.c.b16 %v415, %v414
      %v441 = vpack.c.b16 %v417, %v416
      %v442 = vpack.c.b16 %v419, %v418
      %v443 = vpack.c.b16 %v421, %v420
      %v444 = vpack.c.b16 %v423, %v422
      %v445 = vpack.c.b16 %v425, %v424
      %v446 = vpack.c.b16 %v427, %v426
      %v447 = vpack.c.b16 %v429, %v428
      %v448 = vpack.c.b16 %v431, %v430
      %v449 = vpack.c.b16 %v433, %v432
      %v482 = vunpack.c.l.b16 %v350
      %v483 = vunpack.c.l.b16 %v351
      %v484 = vunpack.c.l.b16 %v352
      %v485 = vunpack.c.l.b16 %v353
      %v486 = vunpack.c.l.b16 %v354
      %v487 = vunpack.c.l.b16 %v355
      %v488 = vunpack.c.l.b16 %v356
      %v489 = vunpack.c.l.b16 %v357
      %v490 = vunpack.c.l.b16 %v358
      %v491 = vunpack.c.l.b16 %v359
      %v492 = vunpack.c.l.b16 %v360
      %v493 = vunpack.c.l.b16 %v361
      %v494 = vunpack.c.l.b16 %v362
      %v495 = vunpack.c.l.b16 %v363
      %v496 = vunpack.c.l.b16 %v364
      %v497 = vunpack.c.l.b16 %v365
      %v498 = vpack.c.b16 %v483, %v482
      %v499 = vpack.c.b16 %v485, %v484
      %v500 = vpack.c.b16 %v487, %v486
      %v501 = vpack.c.b16 %v489, %v488
      %v502 = vpack.c.b16 %v491, %v490
      %v503 = vpack.c.b16 %v493, %v492
      %v504 = vpack.c.b16 %v495, %v494
      %v505 = vpack.c.b16 %v497, %v496
      %514 = vmatpush.bf16.msra.mxu0 %v505
      %515 = vmatpush.bf16.msra.mxu0 %v504
      %516 = vmatpush.bf16.msra.mxu0 %v503
      %517 = vmatpush.bf16.msra.mxu0 %v502
      %518 = vmatpush.bf16.msra.mxu0 %v501
      %519 = vmatpush.bf16.msra.mxu0 %v500
      %520 = vmatpush.bf16.msra.mxu0 %v499
      %521 = vmatpush.bf16.msra.mxu0 %v498
      %522 = vmatmul.bf16.gmra.mxu0 %v434
      %v523 = vpop.f32.mrf.mxu0
      %v524 = vadd.f32 %v368, %v523
      %v525 = vpop.f32.mrf.mxu0
      %v526 = vadd.f32 %v368, %v525
      %527 = vmatmul.bf16.gmra.mxu0 %v435
      %v528 = vpop.f32.mrf.mxu0
      %v529 = vadd.f32 %v368, %v528
      %v530 = vpop.f32.mrf.mxu0
      %v531 = vadd.f32 %v368, %v530
      %532 = vmatmul.bf16.gmra.mxu0 %v436
      %v533 = vpop.f32.mrf.mxu0
      %v534 = vadd.f32 %v368, %v533
      %v535 = vpop.f32.mrf.mxu0
      %v536 = vadd.f32 %v368, %v535
      %537 = vmatmul.bf16.gmra.mxu0 %v437
      %v538 = vpop.f32.mrf.mxu0
      %v539 = vadd.f32 %v368, %v538
      %v540 = vpop.f32.mrf.mxu0
      %v541 = vadd.f32 %v368, %v540
      %542 = vmatmul.bf16.gmra.mxu0 %v438
      %v543 = vpop.f32.mrf.mxu0
      %v544 = vadd.f32 %v368, %v543
      %v545 = vpop.f32.mrf.mxu0
      %v546 = vadd.f32 %v368, %v545
      %547 = vmatmul.bf16.gmra.mxu0 %v439
      %v548 = vpop.f32.mrf.mxu0
      %v549 = vadd.f32 %v368, %v548
      %v550 = vpop.f32.mrf.mxu0
      %v551 = vadd.f32 %v368, %v550
      %552 = vmatmul.bf16.gmra.mxu0 %v440
      %v553 = vpop.f32.mrf.mxu0
      %v554 = vadd.f32 %v368, %v553
      %v555 = vpop.f32.mrf.mxu0
      %v556 = vadd.f32 %v368, %v555
      %557 = vmatmul.bf16.gmra.mxu0 %v441
      %v558 = vpop.f32.mrf.mxu0
      %v559 = vadd.f32 %v368, %v558
      %v560 = vpop.f32.mrf.mxu0
      %v561 = vadd.f32 %v368, %v560
      %562 = vmatmul.bf16.gmra.mxu0 %v442
      %v563 = vpop.f32.mrf.mxu0
      %v564 = vadd.f32 %v368, %v563
      %v565 = vpop.f32.mrf.mxu0
      %v566 = vadd.f32 %v368, %v565
      %567 = vmatmul.bf16.gmra.mxu0 %v443
      %v568 = vpop.f32.mrf.mxu0
      %v569 = vadd.f32 %v368, %v568
      %v570 = vpop.f32.mrf.mxu0
      %v571 = vadd.f32 %v368, %v570
      %572 = vmatmul.bf16.gmra.mxu0 %v444
      %v573 = vpop.f32.mrf.mxu0
      %v574 = vadd.f32 %v368, %v573
      %v575 = vpop.f32.mrf.mxu0
      %v576 = vadd.f32 %v368, %v575
      %577 = vmatmul.bf16.gmra.mxu0 %v445
      %v578 = vpop.f32.mrf.mxu0
      %v579 = vadd.f32 %v368, %v578
      %v580 = vpop.f32.mrf.mxu0
      %v581 = vadd.f32 %v368, %v580
      %582 = vmatmul.bf16.gmra.mxu0 %v446
      %v583 = vpop.f32.mrf.mxu0
      %v584 = vadd.f32 %v368, %v583
      %v585 = vpop.f32.mrf.mxu0
      %v586 = vadd.f32 %v368, %v585
      %587 = vmatmul.bf16.gmra.mxu0 %v447
      %v588 = vpop.f32.mrf.mxu0
      %v589 = vadd.f32 %v368, %v588
      %v590 = vpop.f32.mrf.mxu0
      %v591 = vadd.f32 %v368, %v590
      %592 = vmatmul.bf16.gmra.mxu0 %v448
      %v593 = vpop.f32.mrf.mxu0
      %v594 = vadd.f32 %v368, %v593
      %v595 = vpop.f32.mrf.mxu0
      %v596 = vadd.f32 %v368, %v595
      %597 = vmatmul.bf16.gmra.mxu0 %v449
      %v598 = vpop.f32.mrf.mxu0
      %v599 = vadd.f32 %v368, %v598
      %v600 = vpop.f32.mrf.mxu0
      %v601 = vadd.f32 %v368, %v600
      %602 = vdwg.mxu0
      %v603 = vmax.f32 %v524, 0.0
      %v604 = vmax.f32 %v526, 0.0
      %v605 = vmax.f32 %v529, 0.0
      %v606 = vmax.f32 %v531, 0.0
      %v607 = vmax.f32 %v534, 0.0
      %v608 = vmax.f32 %v536, 0.0
      %v609 = vmax.f32 %v539, 0.0
      %v610 = vmax.f32 %v541, 0.0
      %v611 = vmax.f32 %v544, 0.0
      %v612 = vmax.f32 %v546, 0.0
      %v613 = vmax.f32 %v549, 0.0
      %v614 = vmax.f32 %v551, 0.0
      %v615 = vmax.f32 %v554, 0.0
      %v616 = vmax.f32 %v556, 0.0
      %v617 = vmax.f32 %v559, 0.0
      %v618 = vmax.f32 %v561, 0.0
      %v619 = vmax.f32 %v564, 0.0
      %v620 = vmax.f32 %v566, 0.0
      %v621 = vmax.f32 %v569, 0.0
      %v622 = vmax.f32 %v571, 0.0
      %v623 = vmax.f32 %v574, 0.0
      %v624 = vmax.f32 %v576, 0.0
      %v625 = vmax.f32 %v579, 0.0
      %v626 = vmax.f32 %v581, 0.0
      %v627 = vmax.f32 %v584, 0.0
      %v628 = vmax.f32 %v586, 0.0
      %v629 = vmax.f32 %v589, 0.0
      %v630 = vmax.f32 %v591, 0.0
      %v631 = vmax.f32 %v594, 0.0
      %v632 = vmax.f32 %v596, 0.0
      %v633 = vmax.f32 %v599, 0.0
      %v634 = vmax.f32 %v601, 0.0
      %v635 = vpack.c.bf16 %v604, %v603
      %v636 = vpack.c.bf16 %v606, %v605
      %v637 = vpack.c.bf16 %v608, %v607
      %v638 = vpack.c.bf16 %v610, %v609
      %v639 = vpack.c.bf16 %v612, %v611
      %v640 = vpack.c.bf16 %v614, %v613
      %v641 = vpack.c.bf16 %v616, %v615
      %v642 = vpack.c.bf16 %v618, %v617
      %v643 = vpack.c.bf16 %v620, %v619
      %v644 = vpack.c.bf16 %v622, %v621
      %v645 = vpack.c.bf16 %v624, %v623
      %v646 = vpack.c.bf16 %v626, %v625
      %v647 = vpack.c.bf16 %v628, %v627
      %v648 = vpack.c.bf16 %v630, %v629
      %v649 = vpack.c.bf16 %v632, %v631
      %v650 = vpack.c.bf16 %v634, %v633
      %v651 = vld [vmem:[%s3] sm:$0xf]
      %v652 = vld [vmem:[%s3 + $0x4] sm:$0xf]
      %v653 = vld [vmem:[%s3 + $0x8] sm:$0xf]
      %v654 = vld [vmem:[%s3 + $0xc] sm:$0xf]
      %v655 = vld [vmem:[%s3 + $0x10] sm:$0xf]
      %v656 = vld [vmem:[%s3 + $0x14] sm:$0xf]
      %v657 = vld [vmem:[%s3 + $0x18] sm:$0xf]
      %v658 = vld [vmem:[%s3 + $0x1c] sm:$0xf]
      %v659 = vld [vmem:[%s3 + $0x20] sm:$0xf]
      %v660 = vld [vmem:[%s3 + $0x24] sm:$0xf]
      %v661 = vld [vmem:[%s3 + $0x28] sm:$0xf]
      %v662 = vld [vmem:[%s3 + $0x2c] sm:$0xf]
      %v663 = vld [vmem:[%s3 + $0x30] sm:$0xf]
      %v664 = vld [vmem:[%s3 + $0x34] sm:$0xf]
      %v665 = vld [vmem:[%s3 + $0x38] sm:$0xf]
      %v666 = vld [vmem:[%s3 + $0x3c] sm:$0xf]
      %v667 = vld [vmem:[%s4] sm:$0x1]
      %v669 = vperm.slane %v667, 0
      %v687 = vunpack.c.l.b16 %v651
      %v688 = vunpack.c.l.b16 %v652
      %v689 = vunpack.c.l.b16 %v653
      %v690 = vunpack.c.l.b16 %v654
      %v691 = vunpack.c.l.b16 %v655
      %v692 = vunpack.c.l.b16 %v656
      %v693 = vunpack.c.l.b16 %v657
      %v694 = vunpack.c.l.b16 %v658
      %v695 = vunpack.c.l.b16 %v659
      %v696 = vunpack.c.l.b16 %v660
      %v697 = vunpack.c.l.b16 %v661
      %v698 = vunpack.c.l.b16 %v662
      %v699 = vunpack.c.l.b16 %v663
      %v700 = vunpack.c.l.b16 %v664
      %v701 = vunpack.c.l.b16 %v665
      %v702 = vunpack.c.l.b16 %v666
      %v703 = vpack.c.b16 %v688, %v687
      %v704 = vpack.c.b16 %v690, %v689
      %v705 = vpack.c.b16 %v692, %v691
      %v706 = vpack.c.b16 %v694, %v693
      %v707 = vpack.c.b16 %v696, %v695
      %v708 = vpack.c.b16 %v698, %v697
      %v709 = vpack.c.b16 %v700, %v699
      %v710 = vpack.c.b16 %v702, %v701
      %719 = vmatpush.bf16.msra.mxu0 %v710
      %720 = vmatpush.bf16.msra.mxu0 %v709
      %721 = vmatpush.bf16.msra.mxu0 %v708
      %722 = vmatpush.bf16.msra.mxu0 %v707
      %723 = vmatpush.bf16.msra.mxu0 %v706
      %724 = vmatpush.bf16.msra.mxu0 %v705
      %725 = vmatpush.bf16.msra.mxu0 %v704
      %726 = vmatpush.bf16.msra.mxu0 %v703
      %727 = vmatmul.bf16.gmra.mxu0 %v635
      %v728 = vpop.f32.mrf.mxu0
      %v729 = vadd.f32 %v669, %v728
      %v730 = vpop.f32.mrf.mxu0
      %v731 = vadd.f32 %v669, %v730
      %732 = vmatmul.bf16.gmra.mxu0 %v636
      %v733 = vpop.f32.mrf.mxu0
      %v734 = vadd.f32 %v669, %v733
      %v735 = vpop.f32.mrf.mxu0
      %v736 = vadd.f32 %v669, %v735
      %737 = vmatmul.bf16.gmra.mxu0 %v637
      %v738 = vpop.f32.mrf.mxu0
      %v739 = vadd.f32 %v669, %v738
      %v740 = vpop.f32.mrf.mxu0
      %v741 = vadd.f32 %v669, %v740
      %742 = vmatmul.bf16.gmra.mxu0 %v638
      %v743 = vpop.f32.mrf.mxu0
      %v744 = vadd.f32 %v669, %v743
      %v745 = vpop.f32.mrf.mxu0
      %v746 = vadd.f32 %v669, %v745
      %747 = vmatmul.bf16.gmra.mxu0 %v639
      %v748 = vpop.f32.mrf.mxu0
      %v749 = vadd.f32 %v669, %v748
      %v750 = vpop.f32.mrf.mxu0
      %v751 = vadd.f32 %v669, %v750
      %752 = vmatmul.bf16.gmra.mxu0 %v640
      %v753 = vpop.f32.mrf.mxu0
      %v754 = vadd.f32 %v669, %v753
      %v755 = vpop.f32.mrf.mxu0
      %v756 = vadd.f32 %v669, %v755
      %757 = vmatmul.bf16.gmra.mxu0 %v641
      %v758 = vpop.f32.mrf.mxu0
      %v759 = vadd.f32 %v669, %v758
      %v760 = vpop.f32.mrf.mxu0
      %v761 = vadd.f32 %v669, %v760
      %762 = vmatmul.bf16.gmra.mxu0 %v642
      %v763 = vpop.f32.mrf.mxu0
      %v764 = vadd.f32 %v669, %v763
      %v765 = vpop.f32.mrf.mxu0
      %v766 = vadd.f32 %v669, %v765
      %767 = vmatmul.bf16.gmra.mxu0 %v643
      %v768 = vpop.f32.mrf.mxu0
      %v769 = vadd.f32 %v669, %v768
      %v770 = vpop.f32.mrf.mxu0
      %v771 = vadd.f32 %v669, %v770
      %772 = vmatmul.bf16.gmra.mxu0 %v644
      %v773 = vpop.f32.mrf.mxu0
      %v774 = vadd.f32 %v669, %v773
      %v775 = vpop.f32.mrf.mxu0
      %v776 = vadd.f32 %v669, %v775
      %777 = vmatmul.bf16.gmra.mxu0 %v645
      %v778 = vpop.f32.mrf.mxu0
      %v779 = vadd.f32 %v669, %v778
      %v780 = vpop.f32.mrf.mxu0
      %v781 = vadd.f32 %v669, %v780
      %782 = vmatmul.bf16.gmra.mxu0 %v646
      %v783 = vpop.f32.mrf.mxu0
      %v784 = vadd.f32 %v669, %v783
      %v785 = vpop.f32.mrf.mxu0
      %v786 = vadd.f32 %v669, %v785
      %787 = vmatmul.bf16.gmra.mxu0 %v647
      %v788 = vpop.f32.mrf.mxu0
      %v789 = vadd.f32 %v669, %v788
      %v790 = vpop.f32.mrf.mxu0
      %v791 = vadd.f32 %v669, %v790
      %792 = vmatmul.bf16.gmra.mxu0 %v648
      %v793 = vpop.f32.mrf.mxu0
      %v794 = vadd.f32 %v669, %v793
      %v795 = vpop.f32.mrf.mxu0
      %v796 = vadd.f32 %v669, %v795
      %797 = vmatmul.bf16.gmra.mxu0 %v649
      %v798 = vpop.f32.mrf.mxu0
      %v799 = vadd.f32 %v669, %v798
      %v800 = vpop.f32.mrf.mxu0
      %v801 = vadd.f32 %v669, %v800
      %802 = vmatmul.bf16.gmra.mxu0 %v650
      %v803 = vpop.f32.mrf.mxu0
      %v804 = vadd.f32 %v669, %v803
      %v805 = vpop.f32.mrf.mxu0
      %v806 = vadd.f32 %v669, %v805
      %807 = vdwg.mxu0
      %v808 = vxor.u32 %v729, 2147483648
      %v809 = vxor.u32 %v731, 2147483648
      %v810 = vxor.u32 %v734, 2147483648
      %v811 = vxor.u32 %v736, 2147483648
      %v812 = vxor.u32 %v739, 2147483648
      %v813 = vxor.u32 %v741, 2147483648
      %v814 = vxor.u32 %v744, 2147483648
      %v815 = vxor.u32 %v746, 2147483648
      %v816 = vxor.u32 %v749, 2147483648
      %v817 = vxor.u32 %v751, 2147483648
      %v818 = vxor.u32 %v754, 2147483648
      %v819 = vxor.u32 %v756, 2147483648
      %v820 = vxor.u32 %v759, 2147483648
      %v821 = vxor.u32 %v761, 2147483648
      %v822 = vxor.u32 %v764, 2147483648
      %v823 = vxor.u32 %v766, 2147483648
      %v824 = vxor.u32 %v769, 2147483648
      %v825 = vxor.u32 %v771, 2147483648
      %v826 = vxor.u32 %v774, 2147483648
      %v827 = vxor.u32 %v776, 2147483648
      %v828 = vxor.u32 %v779, 2147483648
      %v829 = vxor.u32 %v781, 2147483648
      %v830 = vxor.u32 %v784, 2147483648
      %v831 = vxor.u32 %v786, 2147483648
      %v832 = vxor.u32 %v789, 2147483648
      %v833 = vxor.u32 %v791, 2147483648
      %v834 = vxor.u32 %v794, 2147483648
      %v835 = vxor.u32 %v796, 2147483648
      %v836 = vxor.u32 %v799, 2147483648
      %v837 = vxor.u32 %v801, 2147483648
      %v838 = vxor.u32 %v804, 2147483648
      %v839 = vxor.u32 %v806, 2147483648
      %v840 = vmul.f32 %v808, 1.442695
      %v841 = vpow.pop %v840
      %v842 = vmul.f32 %v809, 1.442695
      %v843 = vpow.pop %v842
      %v844 = vmul.f32 %v810, 1.442695
      %v845 = vpow.pop %v844
      %v846 = vmul.f32 %v811, 1.442695
      %v847 = vpow.pop %v846
      %v848 = vmul.f32 %v812, 1.442695
      %v849 = vpow.pop %v848
      %v850 = vmul.f32 %v813, 1.442695
      %v851 = vpow.pop %v850
      %v852 = vmul.f32 %v814, 1.442695
      %v853 = vpow.pop %v852
      %v854 = vmul.f32 %v815, 1.442695
      %v855 = vpow.pop %v854
      %v856 = vmul.f32 %v816, 1.442695
      %v857 = vpow.pop %v856
      %v858 = vmul.f32 %v817, 1.442695
      %v859 = vpow.pop %v858
      %v860 = vmul.f32 %v818, 1.442695
      %v861 = vpow.pop %v860
      %v862 = vmul.f32 %v819, 1.442695
      %v863 = vpow.pop %v862
      %v864 = vmul.f32 %v820, 1.442695
      %v865 = vpow.pop %v864
      %v866 = vmul.f32 %v821, 1.442695
      %v867 = vpow.pop %v866
      %v868 = vmul.f32 %v822, 1.442695
      %v869 = vpow.pop %v868
      %v870 = vmul.f32 %v823, 1.442695
      %v871 = vpow.pop %v870
      %v872 = vmul.f32 %v824, 1.442695
      %v873 = vpow.pop %v872
      %v874 = vmul.f32 %v825, 1.442695
      %v875 = vpow.pop %v874
      %v876 = vmul.f32 %v826, 1.442695
      %v877 = vpow.pop %v876
      %v878 = vmul.f32 %v827, 1.442695
      %v879 = vpow.pop %v878
      %v880 = vmul.f32 %v828, 1.442695
      %v881 = vpow.pop %v880
      %v882 = vmul.f32 %v829, 1.442695
      %v883 = vpow.pop %v882
      %v884 = vmul.f32 %v830, 1.442695
      %v885 = vpow.pop %v884
      %v886 = vmul.f32 %v831, 1.442695
      %v887 = vpow.pop %v886
      %v888 = vmul.f32 %v832, 1.442695
      %v889 = vpow.pop %v888
      %v890 = vmul.f32 %v833, 1.442695
      %v891 = vpow.pop %v890
      %v892 = vmul.f32 %v834, 1.442695
      %v893 = vpow.pop %v892
      %v894 = vmul.f32 %v835, 1.442695
      %v895 = vpow.pop %v894
      %v896 = vmul.f32 %v836, 1.442695
      %v897 = vpow.pop %v896
      %v898 = vmul.f32 %v837, 1.442695
      %v899 = vpow.pop %v898
      %v900 = vmul.f32 %v838, 1.442695
      %v901 = vpow.pop %v900
      %v902 = vmul.f32 %v839, 1.442695
      %v903 = vpow.pop %v902
      %v904 = vadd.f32 %v841, 1.0
      %v905 = vadd.f32 %v843, 1.0
      %v906 = vadd.f32 %v845, 1.0
      %v907 = vadd.f32 %v847, 1.0
      %v908 = vadd.f32 %v849, 1.0
      %v909 = vadd.f32 %v851, 1.0
      %v910 = vadd.f32 %v853, 1.0
      %v911 = vadd.f32 %v855, 1.0
      %v912 = vadd.f32 %v857, 1.0
      %v913 = vadd.f32 %v859, 1.0
      %v914 = vadd.f32 %v861, 1.0
      %v915 = vadd.f32 %v863, 1.0
      %v916 = vadd.f32 %v865, 1.0
      %v917 = vadd.f32 %v867, 1.0
      %v918 = vadd.f32 %v869, 1.0
      %v919 = vadd.f32 %v871, 1.0
      %v920 = vadd.f32 %v873, 1.0
      %v921 = vadd.f32 %v875, 1.0
      %v922 = vadd.f32 %v877, 1.0
      %v923 = vadd.f32 %v879, 1.0
      %v924 = vadd.f32 %v881, 1.0
      %v925 = vadd.f32 %v883, 1.0
      %v926 = vadd.f32 %v885, 1.0
      %v927 = vadd.f32 %v887, 1.0
      %v928 = vadd.f32 %v889, 1.0
      %v929 = vadd.f32 %v891, 1.0
      %v930 = vadd.f32 %v893, 1.0
      %v931 = vadd.f32 %v895, 1.0
      %v932 = vadd.f32 %v897, 1.0
      %v933 = vadd.f32 %v899, 1.0
      %v934 = vadd.f32 %v901, 1.0
      %v935 = vadd.f32 %v903, 1.0
      %v936 = vrcp.pop %v904
      %v937 = vmul.f32 %v904, %v936
      %v938 = vsub.f32 1.0, %v937
      %v939 = vmul.f32 %v936, %v938
      %v940 = vadd.f32 %v936, %v939
      %vm941 = vweird.f32 %v904
      %vm942 = vweird.f32 %v936
      %vm943 = vmor %vm941, %vm942
      %v944 = vsel %vm943, %v936, %v940
      %v945 = vand.u32 2147483647, %v904
      %vm946 = vcmp.eq.f32.partialorder %v945, 8.507059e+37
      %v947 = vand.u32 %v904, 2147483648
      %v948 = vor.u32 1.1754944e-38, %v947
      %v949 = vsel %vm946, %v948, %v944
      %v950 = vmul.f32 1.0, %v949
      %v951 = vrcp.pop %v905
      %v952 = vmul.f32 %v905, %v951
      %v953 = vsub.f32 1.0, %v952
      %v954 = vmul.f32 %v951, %v953
      %v955 = vadd.f32 %v951, %v954
      %vm956 = vweird.f32 %v905
      %vm957 = vweird.f32 %v951
      %vm958 = vmor %vm956, %vm957
      %v959 = vsel %vm958, %v951, %v955
      %v960 = vand.u32 2147483647, %v905
      %vm961 = vcmp.eq.f32.partialorder %v960, 8.507059e+37
      %v962 = vand.u32 %v905, 2147483648
      %v963 = vor.u32 1.1754944e-38, %v962
      %v964 = vsel %vm961, %v963, %v959
      %v965 = vmul.f32 1.0, %v964
      %v966 = vrcp.pop %v906
      %v967 = vmul.f32 %v906, %v966
      %v968 = vsub.f32 1.0, %v967
      %v969 = vmul.f32 %v966, %v968
      %v970 = vadd.f32 %v966, %v969
      %vm971 = vweird.f32 %v906
      %vm972 = vweird.f32 %v966
      %vm973 = vmor %vm971, %vm972
      %v974 = vsel %vm973, %v966, %v970
      %v975 = vand.u32 2147483647, %v906
      %vm976 = vcmp.eq.f32.partialorder %v975, 8.507059e+37
      %v977 = vand.u32 %v906, 2147483648
      %v978 = vor.u32 1.1754944e-38, %v977
      %v979 = vsel %vm976, %v978, %v974
      %v980 = vmul.f32 1.0, %v979
      %v981 = vrcp.pop %v907
      %v982 = vmul.f32 %v907, %v981
      %v983 = vsub.f32 1.0, %v982
      %v984 = vmul.f32 %v981, %v983
      %v985 = vadd.f32 %v981, %v984
      %vm986 = vweird.f32 %v907
      %vm987 = vweird.f32 %v981
      %vm988 = vmor %vm986, %vm987
      %v989 = vsel %vm988, %v981, %v985
      %v990 = vand.u32 2147483647, %v907
      %vm991 = vcmp.eq.f32.partialorder %v990, 8.507059e+37
      %v992 = vand.u32 %v907, 2147483648
      %v993 = vor.u32 1.1754944e-38, %v992
      %v994 = vsel %vm991, %v993, %v989
      %v995 = vmul.f32 1.0, %v994
      %v996 = vrcp.pop %v908
      %v997 = vmul.f32 %v908, %v996
      %v998 = vsub.f32 1.0, %v997
      %v999 = vmul.f32 %v996, %v998
      %v1000 = vadd.f32 %v996, %v999
      %vm1001 = vweird.f32 %v908
      %vm1002 = vweird.f32 %v996
      %vm1003 = vmor %vm1001, %vm1002
      %v1004 = vsel %vm1003, %v996, %v1000
      %v1005 = vand.u32 2147483647, %v908
      %vm1006 = vcmp.eq.f32.partialorder %v1005, 8.507059e+37
      %v1007 = vand.u32 %v908, 2147483648
      %v1008 = vor.u32 1.1754944e-38, %v1007
      %v1009 = vsel %vm1006, %v1008, %v1004
      %v1010 = vmul.f32 1.0, %v1009
      %v1011 = vrcp.pop %v909
      %v1012 = vmul.f32 %v909, %v1011
      %v1013 = vsub.f32 1.0, %v1012
      %v1014 = vmul.f32 %v1011, %v1013
      %v1015 = vadd.f32 %v1011, %v1014
      %vm1016 = vweird.f32 %v909
      %vm1017 = vweird.f32 %v1011
      %vm1018 = vmor %vm1016, %vm1017
      %v1019 = vsel %vm1018, %v1011, %v1015
      %v1020 = vand.u32 2147483647, %v909
      %vm1021 = vcmp.eq.f32.partialorder %v1020, 8.507059e+37
      %v1022 = vand.u32 %v909, 2147483648
      %v1023 = vor.u32 1.1754944e-38, %v1022
      %v1024 = vsel %vm1021, %v1023, %v1019
      %v1025 = vmul.f32 1.0, %v1024
      %v1026 = vrcp.pop %v910
      %v1027 = vmul.f32 %v910, %v1026
      %v1028 = vsub.f32 1.0, %v1027
      %v1029 = vmul.f32 %v1026, %v1028
      %v1030 = vadd.f32 %v1026, %v1029
      %vm1031 = vweird.f32 %v910
      %vm1032 = vweird.f32 %v1026
      %vm1033 = vmor %vm1031, %vm1032
      %v1034 = vsel %vm1033, %v1026, %v1030
      %v1035 = vand.u32 2147483647, %v910
      %vm1036 = vcmp.eq.f32.partialorder %v1035, 8.507059e+37
      %v1037 = vand.u32 %v910, 2147483648
      %v1038 = vor.u32 1.1754944e-38, %v1037
      %v1039 = vsel %vm1036, %v1038, %v1034
      %v1040 = vmul.f32 1.0, %v1039
      %v1041 = vrcp.pop %v911
      %v1042 = vmul.f32 %v911, %v1041
      %v1043 = vsub.f32 1.0, %v1042
      %v1044 = vmul.f32 %v1041, %v1043
      %v1045 = vadd.f32 %v1041, %v1044
      %vm1046 = vweird.f32 %v911
      %vm1047 = vweird.f32 %v1041
      %vm1048 = vmor %vm1046, %vm1047
      %v1049 = vsel %vm1048, %v1041, %v1045
      %v1050 = vand.u32 2147483647, %v911
      %vm1051 = vcmp.eq.f32.partialorder %v1050, 8.507059e+37
      %v1052 = vand.u32 %v911, 2147483648
      %v1053 = vor.u32 1.1754944e-38, %v1052
      %v1054 = vsel %vm1051, %v1053, %v1049
      %v1055 = vmul.f32 1.0, %v1054
      %v1056 = vrcp.pop %v912
      %v1057 = vmul.f32 %v912, %v1056
      %v1058 = vsub.f32 1.0, %v1057
      %v1059 = vmul.f32 %v1056, %v1058
      %v1060 = vadd.f32 %v1056, %v1059
      %vm1061 = vweird.f32 %v912
      %vm1062 = vweird.f32 %v1056
      %vm1063 = vmor %vm1061, %vm1062
      %v1064 = vsel %vm1063, %v1056, %v1060
      %v1065 = vand.u32 2147483647, %v912
      %vm1066 = vcmp.eq.f32.partialorder %v1065, 8.507059e+37
      %v1067 = vand.u32 %v912, 2147483648
      %v1068 = vor.u32 1.1754944e-38, %v1067
      %v1069 = vsel %vm1066, %v1068, %v1064
      %v1070 = vmul.f32 1.0, %v1069
      %v1071 = vrcp.pop %v913
      %v1072 = vmul.f32 %v913, %v1071
      %v1073 = vsub.f32 1.0, %v1072
      %v1074 = vmul.f32 %v1071, %v1073
      %v1075 = vadd.f32 %v1071, %v1074
      %vm1076 = vweird.f32 %v913
      %vm1077 = vweird.f32 %v1071
      %vm1078 = vmor %vm1076, %vm1077
      %v1079 = vsel %vm1078, %v1071, %v1075
      %v1080 = vand.u32 2147483647, %v913
      %vm1081 = vcmp.eq.f32.partialorder %v1080, 8.507059e+37
      %v1082 = vand.u32 %v913, 2147483648
      %v1083 = vor.u32 1.1754944e-38, %v1082
      %v1084 = vsel %vm1081, %v1083, %v1079
      %v1085 = vmul.f32 1.0, %v1084
      %v1086 = vrcp.pop %v914
      %v1087 = vmul.f32 %v914, %v1086
      %v1088 = vsub.f32 1.0, %v1087
      %v1089 = vmul.f32 %v1086, %v1088
      %v1090 = vadd.f32 %v1086, %v1089
      %vm1091 = vweird.f32 %v914
      %vm1092 = vweird.f32 %v1086
      %vm1093 = vmor %vm1091, %vm1092
      %v1094 = vsel %vm1093, %v1086, %v1090
      %v1095 = vand.u32 2147483647, %v914
      %vm1096 = vcmp.eq.f32.partialorder %v1095, 8.507059e+37
      %v1097 = vand.u32 %v914, 2147483648
      %v1098 = vor.u32 1.1754944e-38, %v1097
      %v1099 = vsel %vm1096, %v1098, %v1094
      %v1100 = vmul.f32 1.0, %v1099
      %v1101 = vrcp.pop %v915
      %v1102 = vmul.f32 %v915, %v1101
      %v1103 = vsub.f32 1.0, %v1102
      %v1104 = vmul.f32 %v1101, %v1103
      %v1105 = vadd.f32 %v1101, %v1104
      %vm1106 = vweird.f32 %v915
      %vm1107 = vweird.f32 %v1101
      %vm1108 = vmor %vm1106, %vm1107
      %v1109 = vsel %vm1108, %v1101, %v1105
      %v1110 = vand.u32 2147483647, %v915
      %vm1111 = vcmp.eq.f32.partialorder %v1110, 8.507059e+37
      %v1112 = vand.u32 %v915, 2147483648
      %v1113 = vor.u32 1.1754944e-38, %v1112
      %v1114 = vsel %vm1111, %v1113, %v1109
      %v1115 = vmul.f32 1.0, %v1114
      %v1116 = vrcp.pop %v916
      %v1117 = vmul.f32 %v916, %v1116
      %v1118 = vsub.f32 1.0, %v1117
      %v1119 = vmul.f32 %v1116, %v1118
      %v1120 = vadd.f32 %v1116, %v1119
      %vm1121 = vweird.f32 %v916
      %vm1122 = vweird.f32 %v1116
      %vm1123 = vmor %vm1121, %vm1122
      %v1124 = vsel %vm1123, %v1116, %v1120
      %v1125 = vand.u32 2147483647, %v916
      %vm1126 = vcmp.eq.f32.partialorder %v1125, 8.507059e+37
      %v1127 = vand.u32 %v916, 2147483648
      %v1128 = vor.u32 1.1754944e-38, %v1127
      %v1129 = vsel %vm1126, %v1128, %v1124
      %v1130 = vmul.f32 1.0, %v1129
      %v1131 = vrcp.pop %v917
      %v1132 = vmul.f32 %v917, %v1131
      %v1133 = vsub.f32 1.0, %v1132
      %v1134 = vmul.f32 %v1131, %v1133
      %v1135 = vadd.f32 %v1131, %v1134
      %vm1136 = vweird.f32 %v917
      %vm1137 = vweird.f32 %v1131
      %vm1138 = vmor %vm1136, %vm1137
      %v1139 = vsel %vm1138, %v1131, %v1135
      %v1140 = vand.u32 2147483647, %v917
      %vm1141 = vcmp.eq.f32.partialorder %v1140, 8.507059e+37
      %v1142 = vand.u32 %v917, 2147483648
      %v1143 = vor.u32 1.1754944e-38, %v1142
      %v1144 = vsel %vm1141, %v1143, %v1139
      %v1145 = vmul.f32 1.0, %v1144
      %v1146 = vrcp.pop %v918
      %v1147 = vmul.f32 %v918, %v1146
      %v1148 = vsub.f32 1.0, %v1147
      %v1149 = vmul.f32 %v1146, %v1148
      %v1150 = vadd.f32 %v1146, %v1149
      %vm1151 = vweird.f32 %v918
      %vm1152 = vweird.f32 %v1146
      %vm1153 = vmor %vm1151, %vm1152
      %v1154 = vsel %vm1153, %v1146, %v1150
      %v1155 = vand.u32 2147483647, %v918
      %vm1156 = vcmp.eq.f32.partialorder %v1155, 8.507059e+37
      %v1157 = vand.u32 %v918, 2147483648
      %v1158 = vor.u32 1.1754944e-38, %v1157
      %v1159 = vsel %vm1156, %v1158, %v1154
      %v1160 = vmul.f32 1.0, %v1159
      %v1161 = vrcp.pop %v919
      %v1162 = vmul.f32 %v919, %v1161
      %v1163 = vsub.f32 1.0, %v1162
      %v1164 = vmul.f32 %v1161, %v1163
      %v1165 = vadd.f32 %v1161, %v1164
      %vm1166 = vweird.f32 %v919
      %vm1167 = vweird.f32 %v1161
      %vm1168 = vmor %vm1166, %vm1167
      %v1169 = vsel %vm1168, %v1161, %v1165
      %v1170 = vand.u32 2147483647, %v919
      %vm1171 = vcmp.eq.f32.partialorder %v1170, 8.507059e+37
      %v1172 = vand.u32 %v919, 2147483648
      %v1173 = vor.u32 1.1754944e-38, %v1172
      %v1174 = vsel %vm1171, %v1173, %v1169
      %v1175 = vmul.f32 1.0, %v1174
      %v1176 = vrcp.pop %v920
      %v1177 = vmul.f32 %v920, %v1176
      %v1178 = vsub.f32 1.0, %v1177
      %v1179 = vmul.f32 %v1176, %v1178
      %v1180 = vadd.f32 %v1176, %v1179
      %vm1181 = vweird.f32 %v920
      %vm1182 = vweird.f32 %v1176
      %vm1183 = vmor %vm1181, %vm1182
      %v1184 = vsel %vm1183, %v1176, %v1180
      %v1185 = vand.u32 2147483647, %v920
      %vm1186 = vcmp.eq.f32.partialorder %v1185, 8.507059e+37
      %v1187 = vand.u32 %v920, 2147483648
      %v1188 = vor.u32 1.1754944e-38, %v1187
      %v1189 = vsel %vm1186, %v1188, %v1184
      %v1190 = vmul.f32 1.0, %v1189
      %v1191 = vrcp.pop %v921
      %v1192 = vmul.f32 %v921, %v1191
      %v1193 = vsub.f32 1.0, %v1192
      %v1194 = vmul.f32 %v1191, %v1193
      %v1195 = vadd.f32 %v1191, %v1194
      %vm1196 = vweird.f32 %v921
      %vm1197 = vweird.f32 %v1191
      %vm1198 = vmor %vm1196, %vm1197
      %v1199 = vsel %vm1198, %v1191, %v1195
      %v1200 = vand.u32 2147483647, %v921
      %vm1201 = vcmp.eq.f32.partialorder %v1200, 8.507059e+37
      %v1202 = vand.u32 %v921, 2147483648
      %v1203 = vor.u32 1.1754944e-38, %v1202
      %v1204 = vsel %vm1201, %v1203, %v1199
      %v1205 = vmul.f32 1.0, %v1204
      %v1206 = vrcp.pop %v922
      %v1207 = vmul.f32 %v922, %v1206
      %v1208 = vsub.f32 1.0, %v1207
      %v1209 = vmul.f32 %v1206, %v1208
      %v1210 = vadd.f32 %v1206, %v1209
      %vm1211 = vweird.f32 %v922
      %vm1212 = vweird.f32 %v1206
      %vm1213 = vmor %vm1211, %vm1212
      %v1214 = vsel %vm1213, %v1206, %v1210
      %v1215 = vand.u32 2147483647, %v922
      %vm1216 = vcmp.eq.f32.partialorder %v1215, 8.507059e+37
      %v1217 = vand.u32 %v922, 2147483648
      %v1218 = vor.u32 1.1754944e-38, %v1217
      %v1219 = vsel %vm1216, %v1218, %v1214
      %v1220 = vmul.f32 1.0, %v1219
      %v1221 = vrcp.pop %v923
      %v1222 = vmul.f32 %v923, %v1221
      %v1223 = vsub.f32 1.0, %v1222
      %v1224 = vmul.f32 %v1221, %v1223
      %v1225 = vadd.f32 %v1221, %v1224
      %vm1226 = vweird.f32 %v923
      %vm1227 = vweird.f32 %v1221
      %vm1228 = vmor %vm1226, %vm1227
      %v1229 = vsel %vm1228, %v1221, %v1225
      %v1230 = vand.u32 2147483647, %v923
      %vm1231 = vcmp.eq.f32.partialorder %v1230, 8.507059e+37
      %v1232 = vand.u32 %v923, 2147483648
      %v1233 = vor.u32 1.1754944e-38, %v1232
      %v1234 = vsel %vm1231, %v1233, %v1229
      %v1235 = vmul.f32 1.0, %v1234
      %v1236 = vrcp.pop %v924
      %v1237 = vmul.f32 %v924, %v1236
      %v1238 = vsub.f32 1.0, %v1237
      %v1239 = vmul.f32 %v1236, %v1238
      %v1240 = vadd.f32 %v1236, %v1239
      %vm1241 = vweird.f32 %v924
      %vm1242 = vweird.f32 %v1236
      %vm1243 = vmor %vm1241, %vm1242
      %v1244 = vsel %vm1243, %v1236, %v1240
      %v1245 = vand.u32 2147483647, %v924
      %vm1246 = vcmp.eq.f32.partialorder %v1245, 8.507059e+37
      %v1247 = vand.u32 %v924, 2147483648
      %v1248 = vor.u32 1.1754944e-38, %v1247
      %v1249 = vsel %vm1246, %v1248, %v1244
      %v1250 = vmul.f32 1.0, %v1249
      %v1251 = vrcp.pop %v925
      %v1252 = vmul.f32 %v925, %v1251
      %v1253 = vsub.f32 1.0, %v1252
      %v1254 = vmul.f32 %v1251, %v1253
      %v1255 = vadd.f32 %v1251, %v1254
      %vm1256 = vweird.f32 %v925
      %vm1257 = vweird.f32 %v1251
      %vm1258 = vmor %vm1256, %vm1257
      %v1259 = vsel %vm1258, %v1251, %v1255
      %v1260 = vand.u32 2147483647, %v925
      %vm1261 = vcmp.eq.f32.partialorder %v1260, 8.507059e+37
      %v1262 = vand.u32 %v925, 2147483648
      %v1263 = vor.u32 1.1754944e-38, %v1262
      %v1264 = vsel %vm1261, %v1263, %v1259
      %v1265 = vmul.f32 1.0, %v1264
      %v1266 = vrcp.pop %v926
      %v1267 = vmul.f32 %v926, %v1266
      %v1268 = vsub.f32 1.0, %v1267
      %v1269 = vmul.f32 %v1266, %v1268
      %v1270 = vadd.f32 %v1266, %v1269
      %vm1271 = vweird.f32 %v926
      %vm1272 = vweird.f32 %v1266
      %vm1273 = vmor %vm1271, %vm1272
      %v1274 = vsel %vm1273, %v1266, %v1270
      %v1275 = vand.u32 2147483647, %v926
      %vm1276 = vcmp.eq.f32.partialorder %v1275, 8.507059e+37
      %v1277 = vand.u32 %v926, 2147483648
      %v1278 = vor.u32 1.1754944e-38, %v1277
      %v1279 = vsel %vm1276, %v1278, %v1274
      %v1280 = vmul.f32 1.0, %v1279
      %v1281 = vrcp.pop %v927
      %v1282 = vmul.f32 %v927, %v1281
      %v1283 = vsub.f32 1.0, %v1282
      %v1284 = vmul.f32 %v1281, %v1283
      %v1285 = vadd.f32 %v1281, %v1284
      %vm1286 = vweird.f32 %v927
      %vm1287 = vweird.f32 %v1281
      %vm1288 = vmor %vm1286, %vm1287
      %v1289 = vsel %vm1288, %v1281, %v1285
      %v1290 = vand.u32 2147483647, %v927
      %vm1291 = vcmp.eq.f32.partialorder %v1290, 8.507059e+37
      %v1292 = vand.u32 %v927, 2147483648
      %v1293 = vor.u32 1.1754944e-38, %v1292
      %v1294 = vsel %vm1291, %v1293, %v1289
      %v1295 = vmul.f32 1.0, %v1294
      %v1296 = vrcp.pop %v928
      %v1297 = vmul.f32 %v928, %v1296
      %v1298 = vsub.f32 1.0, %v1297
      %v1299 = vmul.f32 %v1296, %v1298
      %v1300 = vadd.f32 %v1296, %v1299
      %vm1301 = vweird.f32 %v928
      %vm1302 = vweird.f32 %v1296
      %vm1303 = vmor %vm1301, %vm1302
      %v1304 = vsel %vm1303, %v1296, %v1300
      %v1305 = vand.u32 2147483647, %v928
      %vm1306 = vcmp.eq.f32.partialorder %v1305, 8.507059e+37
      %v1307 = vand.u32 %v928, 2147483648
      %v1308 = vor.u32 1.1754944e-38, %v1307
      %v1309 = vsel %vm1306, %v1308, %v1304
      %v1310 = vmul.f32 1.0, %v1309
      %v1311 = vrcp.pop %v929
      %v1312 = vmul.f32 %v929, %v1311
      %v1313 = vsub.f32 1.0, %v1312
      %v1314 = vmul.f32 %v1311, %v1313
      %v1315 = vadd.f32 %v1311, %v1314
      %vm1316 = vweird.f32 %v929
      %vm1317 = vweird.f32 %v1311
      %vm1318 = vmor %vm1316, %vm1317
      %v1319 = vsel %vm1318, %v1311, %v1315
      %v1320 = vand.u32 2147483647, %v929
      %vm1321 = vcmp.eq.f32.partialorder %v1320, 8.507059e+37
      %v1322 = vand.u32 %v929, 2147483648
      %v1323 = vor.u32 1.1754944e-38, %v1322
      %v1324 = vsel %vm1321, %v1323, %v1319
      %v1325 = vmul.f32 1.0, %v1324
      %v1326 = vrcp.pop %v930
      %v1327 = vmul.f32 %v930, %v1326
      %v1328 = vsub.f32 1.0, %v1327
      %v1329 = vmul.f32 %v1326, %v1328
      %v1330 = vadd.f32 %v1326, %v1329
      %vm1331 = vweird.f32 %v930
      %vm1332 = vweird.f32 %v1326
      %vm1333 = vmor %vm1331, %vm1332
      %v1334 = vsel %vm1333, %v1326, %v1330
      %v1335 = vand.u32 2147483647, %v930
      %vm1336 = vcmp.eq.f32.partialorder %v1335, 8.507059e+37
      %v1337 = vand.u32 %v930, 2147483648
      %v1338 = vor.u32 1.1754944e-38, %v1337
      %v1339 = vsel %vm1336, %v1338, %v1334
      %v1340 = vmul.f32 1.0, %v1339
      %v1341 = vrcp.pop %v931
      %v1342 = vmul.f32 %v931, %v1341
      %v1343 = vsub.f32 1.0, %v1342
      %v1344 = vmul.f32 %v1341, %v1343
      %v1345 = vadd.f32 %v1341, %v1344
      %vm1346 = vweird.f32 %v931
      %vm1347 = vweird.f32 %v1341
      %vm1348 = vmor %vm1346, %vm1347
      %v1349 = vsel %vm1348, %v1341, %v1345
      %v1350 = vand.u32 2147483647, %v931
      %vm1351 = vcmp.eq.f32.partialorder %v1350, 8.507059e+37
      %v1352 = vand.u32 %v931, 2147483648
      %v1353 = vor.u32 1.1754944e-38, %v1352
      %v1354 = vsel %vm1351, %v1353, %v1349
      %v1355 = vmul.f32 1.0, %v1354
      %v1356 = vrcp.pop %v932
      %v1357 = vmul.f32 %v932, %v1356
      %v1358 = vsub.f32 1.0, %v1357
      %v1359 = vmul.f32 %v1356, %v1358
      %v1360 = vadd.f32 %v1356, %v1359
      %vm1361 = vweird.f32 %v932
      %vm1362 = vweird.f32 %v1356
      %vm1363 = vmor %vm1361, %vm1362
      %v1364 = vsel %vm1363, %v1356, %v1360
      %v1365 = vand.u32 2147483647, %v932
      %vm1366 = vcmp.eq.f32.partialorder %v1365, 8.507059e+37
      %v1367 = vand.u32 %v932, 2147483648
      %v1368 = vor.u32 1.1754944e-38, %v1367
      %v1369 = vsel %vm1366, %v1368, %v1364
      %v1370 = vmul.f32 1.0, %v1369
      %v1371 = vrcp.pop %v933
      %v1372 = vmul.f32 %v933, %v1371
      %v1373 = vsub.f32 1.0, %v1372
      %v1374 = vmul.f32 %v1371, %v1373
      %v1375 = vadd.f32 %v1371, %v1374
      %vm1376 = vweird.f32 %v933
      %vm1377 = vweird.f32 %v1371
      %vm1378 = vmor %vm1376, %vm1377
      %v1379 = vsel %vm1378, %v1371, %v1375
      %v1380 = vand.u32 2147483647, %v933
      %vm1381 = vcmp.eq.f32.partialorder %v1380, 8.507059e+37
      %v1382 = vand.u32 %v933, 2147483648
      %v1383 = vor.u32 1.1754944e-38, %v1382
      %v1384 = vsel %vm1381, %v1383, %v1379
      %v1385 = vmul.f32 1.0, %v1384
      %v1386 = vrcp.pop %v934
      %v1387 = vmul.f32 %v934, %v1386
      %v1388 = vsub.f32 1.0, %v1387
      %v1389 = vmul.f32 %v1386, %v1388
      %v1390 = vadd.f32 %v1386, %v1389
      %vm1391 = vweird.f32 %v934
      %vm1392 = vweird.f32 %v1386
      %vm1393 = vmor %vm1391, %vm1392
      %v1394 = vsel %vm1393, %v1386, %v1390
      %v1395 = vand.u32 2147483647, %v934
      %vm1396 = vcmp.eq.f32.partialorder %v1395, 8.507059e+37
      %v1397 = vand.u32 %v934, 2147483648
      %v1398 = vor.u32 1.1754944e-38, %v1397
      %v1399 = vsel %vm1396, %v1398, %v1394
      %v1400 = vmul.f32 1.0, %v1399
      %v1401 = vrcp.pop %v935
      %v1402 = vmul.f32 %v935, %v1401
      %v1403 = vsub.f32 1.0, %v1402
      %v1404 = vmul.f32 %v1401, %v1403
      %v1405 = vadd.f32 %v1401, %v1404
      %vm1406 = vweird.f32 %v935
      %vm1407 = vweird.f32 %v1401
      %vm1408 = vmor %vm1406, %vm1407
      %v1409 = vsel %vm1408, %v1401, %v1405
      %v1410 = vand.u32 2147483647, %v935
      %vm1411 = vcmp.eq.f32.partialorder %v1410, 8.507059e+37
      %v1412 = vand.u32 %v935, 2147483648
      %v1413 = vor.u32 1.1754944e-38, %v1412
      %v1414 = vsel %vm1411, %v1413, %v1409
      %v1415 = vmul.f32 1.0, %v1414
      %vm1416 = vcmask 23552
      %1417 = vst.msk [vmem:[%s310] sm:$0xff] %vm1416, %v950
      %1418 = vst.msk [vmem:[%s310 + $0x8] sm:$0xff] %vm1416, %v965
      %1419 = vst.msk [vmem:[%s310 + $0x10] sm:$0xff] %vm1416, %v980
      %1420 = vst.msk [vmem:[%s310 + $0x18] sm:$0xff] %vm1416, %v995
      %1421 = vst.msk [vmem:[%s310 + $0x20] sm:$0xff] %vm1416, %v1010
      %1422 = vst.msk [vmem:[%s310 + $0x28] sm:$0xff] %vm1416, %v1025
      %1423 = vst.msk [vmem:[%s310 + $0x30] sm:$0xff] %vm1416, %v1040
      %1424 = vst.msk [vmem:[%s310 + $0x38] sm:$0xff] %vm1416, %v1055
      %1425 = vst.msk [vmem:[%s310 + $0x40] sm:$0xff] %vm1416, %v1070
      %1426 = vst.msk [vmem:[%s310 + $0x48] sm:$0xff] %vm1416, %v1085
      %1427 = vst.msk [vmem:[%s310 + $0x50] sm:$0xff] %vm1416, %v1100
      %1428 = vst.msk [vmem:[%s310 + $0x58] sm:$0xff] %vm1416, %v1115
      %1429 = vst.msk [vmem:[%s310 + $0x60] sm:$0xff] %vm1416, %v1130
      %1430 = vst.msk [vmem:[%s310 + $0x68] sm:$0xff] %vm1416, %v1145
      %1431 = vst.msk [vmem:[%s310 + $0x70] sm:$0xff] %vm1416, %v1160
      %1432 = vst.msk [vmem:[%s310 + $0x78] sm:$0xff] %vm1416, %v1175
      %1433 = vst.msk [vmem:[%s310 + $0x80] sm:$0xff] %vm1416, %v1190
      %1434 = vst.msk [vmem:[%s310 + $0x88] sm:$0xff] %vm1416, %v1205
      %1435 = vst.msk [vmem:[%s310 + $0x90] sm:$0xff] %vm1416, %v1220
      %1436 = vst.msk [vmem:[%s310 + $0x98] sm:$0xff] %vm1416, %v1235
      %1437 = vst.msk [vmem:[%s310 + $0xa0] sm:$0xff] %vm1416, %v1250
      %1438 = vst.msk [vmem:[%s310 + $0xa8] sm:$0xff] %vm1416, %v1265
      %1439 = vst.msk [vmem:[%s310 + $0xb0] sm:$0xff] %vm1416, %v1280
      %1440 = vst.msk [vmem:[%s310 + $0xb8] sm:$0xff] %vm1416, %v1295
      %1441 = vst.msk [vmem:[%s310 + $0xc0] sm:$0xff] %vm1416, %v1310
      %1442 = vst.msk [vmem:[%s310 + $0xc8] sm:$0xff] %vm1416, %v1325
      %1443 = vst.msk [vmem:[%s310 + $0xd0] sm:$0xff] %vm1416, %v1340
      %1444 = vst.msk [vmem:[%s310 + $0xd8] sm:$0xff] %vm1416, %v1355
      %1445 = vst.msk [vmem:[%s310 + $0xe0] sm:$0xff] %vm1416, %v1370
      %1446 = vst.msk [vmem:[%s310 + $0xe8] sm:$0xff] %vm1416, %v1385
      %1447 = vst.msk [vmem:[%s310 + $0xf0] sm:$0xff] %vm1416, %v1400
      %1448 = vst.msk [vmem:[%s310 + $0xf8] sm:$0xff] %vm1416, %v1415
      %v1449 = vadd.f32 %v729, 0.0
      %v1450 = vadd.f32 %v731, 0.0
      %v1451 = vadd.f32 %v734, 0.0
      %v1452 = vadd.f32 %v736, 0.0
      %v1453 = vadd.f32 %v739, 0.0
      %v1454 = vadd.f32 %v741, 0.0
      %v1455 = vadd.f32 %v744, 0.0
      %v1456 = vadd.f32 %v746, 0.0
      %v1457 = vadd.f32 %v749, 0.0
      %v1458 = vadd.f32 %v751, 0.0
      %v1459 = vadd.f32 %v754, 0.0
      %v1460 = vadd.f32 %v756, 0.0
      %v1461 = vadd.f32 %v759, 0.0
      %v1462 = vadd.f32 %v761, 0.0
      %v1463 = vadd.f32 %v764, 0.0
      %v1464 = vadd.f32 %v766, 0.0
      %v1465 = vadd.f32 %v769, 0.0
      %v1466 = vadd.f32 %v771, 0.0
      %v1467 = vadd.f32 %v774, 0.0
      %v1468 = vadd.f32 %v776, 0.0
      %v1469 = vadd.f32 %v779, 0.0
      %v1470 = vadd.f32 %v781, 0.0
      %v1471 = vadd.f32 %v784, 0.0
      %v1472 = vadd.f32 %v786, 0.0
      %v1473 = vadd.f32 %v789, 0.0
      %v1474 = vadd.f32 %v791, 0.0
      %v1475 = vadd.f32 %v794, 0.0
      %v1476 = vadd.f32 %v796, 0.0
      %v1477 = vadd.f32 %v799, 0.0
      %v1478 = vadd.f32 %v801, 0.0
      %v1479 = vadd.f32 %v804, 0.0
      %v1480 = vadd.f32 %v806, 0.0
      %v1481 = vmax.f32 %v1449, -4.1351666
      %v1482 = vmax.f32 %v1450, -4.1351666
      %v1483 = vmax.f32 %v1451, -4.1351666
      %v1484 = vmax.f32 %v1452, -4.1351666
      %v1485 = vmax.f32 %v1453, -4.1351666
      %v1486 = vmax.f32 %v1454, -4.1351666
      %v1487 = vmax.f32 %v1455, -4.1351666
      %v1488 = vmax.f32 %v1456, -4.1351666
      %v1489 = vmax.f32 %v1457, -4.1351666
      %v1490 = vmax.f32 %v1458, -4.1351666
      %v1491 = vmax.f32 %v1459, -4.1351666
      %v1492 = vmax.f32 %v1460, -4.1351666
      %v1493 = vmax.f32 %v1461, -4.1351666
      %v1494 = vmax.f32 %v1462, -4.1351666
      %v1495 = vmax.f32 %v1463, -4.1351666
      %v1496 = vmax.f32 %v1464, -4.1351666
      %v1497 = vmax.f32 %v1465, -4.1351666
      %v1498 = vmax.f32 %v1466, -4.1351666
      %v1499 = vmax.f32 %v1467, -4.1351666
      %v1500 = vmax.f32 %v1468, -4.1351666
      %v1501 = vmax.f32 %v1469, -4.1351666
      %v1502 = vmax.f32 %v1470, -4.1351666
      %v1503 = vmax.f32 %v1471, -4.1351666
      %v1504 = vmax.f32 %v1472, -4.1351666
      %v1505 = vmax.f32 %v1473, -4.1351666
      %v1506 = vmax.f32 %v1474, -4.1351666
      %v1507 = vmax.f32 %v1475, -4.1351666
      %v1508 = vmax.f32 %v1476, -4.1351666
      %v1509 = vmax.f32 %v1477, -4.1351666
      %v1510 = vmax.f32 %v1478, -4.1351666
      %v1511 = vmax.f32 %v1479, -4.1351666
      %v1512 = vmax.f32 %v1480, -4.1351666
      %v1513 = vmin.f32 %v1481, 4.1351666
      %v1514 = vmin.f32 %v1482, 4.1351666
      %v1515 = vmin.f32 %v1483, 4.1351666
      %v1516 = vmin.f32 %v1484, 4.1351666
      %v1517 = vmin.f32 %v1485, 4.1351666
      %v1518 = vmin.f32 %v1486, 4.1351666
      %v1519 = vmin.f32 %v1487, 4.1351666
      %v1520 = vmin.f32 %v1488, 4.1351666
      %v1521 = vmin.f32 %v1489, 4.1351666
      %v1522 = vmin.f32 %v1490, 4.1351666
      %v1523 = vmin.f32 %v1491, 4.1351666
      %v1524 = vmin.f32 %v1492, 4.1351666
      %v1525 = vmin.f32 %v1493, 4.1351666
      %v1526 = vmin.f32 %v1494, 4.1351666
      %v1527 = vmin.f32 %v1495, 4.1351666
      %v1528 = vmin.f32 %v1496, 4.1351666
      %v1529 = vmin.f32 %v1497, 4.1351666
      %v1530 = vmin.f32 %v1498, 4.1351666
      %v1531 = vmin.f32 %v1499, 4.1351666
      %v1532 = vmin.f32 %v1500, 4.1351666
      %v1533 = vmin.f32 %v1501, 4.1351666
      %v1534 = vmin.f32 %v1502, 4.1351666
      %v1535 = vmin.f32 %v1503, 4.1351666
      %v1536 = vmin.f32 %v1504, 4.1351666
      %v1537 = vmin.f32 %v1505, 4.1351666
      %v1538 = vmin.f32 %v1506, 4.1351666
      %v1539 = vmin.f32 %v1507, 4.1351666
      %v1540 = vmin.f32 %v1508, 4.1351666
      %v1541 = vmin.f32 %v1509, 4.1351666
      %v1542 = vmin.f32 %v1510, 4.1351666
      %v1543 = vmin.f32 %v1511, 4.1351666
      %v1544 = vmin.f32 %v1512, 4.1351666
      %v1545 = vld [vmem:[%s304] sm:$0xff]
      %v1546 = vld [vmem:[%s304 + $0x8] sm:$0xff]
      %v1547 = vld [vmem:[%s304 + $0x10] sm:$0xff]
      %v1548 = vld [vmem:[%s304 + $0x18] sm:$0xff]
      %v1549 = vld [vmem:[%s304 + $0x20] sm:$0xff]
      %v1550 = vld [vmem:[%s304 + $0x28] sm:$0xff]
      %v1551 = vld [vmem:[%s304 + $0x30] sm:$0xff]
      %v1552 = vld [vmem:[%s304 + $0x38] sm:$0xff]
      %v1553 = vld [vmem:[%s304 + $0x40] sm:$0xff]
      %v1554 = vld [vmem:[%s304 + $0x48] sm:$0xff]
      %v1555 = vld [vmem:[%s304 + $0x50] sm:$0xff]
      %v1556 = vld [vmem:[%s304 + $0x58] sm:$0xff]
      %v1557 = vld [vmem:[%s304 + $0x60] sm:$0xff]
      %v1558 = vld [vmem:[%s304 + $0x68] sm:$0xff]
      %v1559 = vld [vmem:[%s304 + $0x70] sm:$0xff]
      %v1560 = vld [vmem:[%s304 + $0x78] sm:$0xff]
      %v1561 = vld [vmem:[%s304 + $0x80] sm:$0xff]
      %v1562 = vld [vmem:[%s304 + $0x88] sm:$0xff]
      %v1563 = vld [vmem:[%s304 + $0x90] sm:$0xff]
      %v1564 = vld [vmem:[%s304 + $0x98] sm:$0xff]
      %v1565 = vld [vmem:[%s304 + $0xa0] sm:$0xff]
      %v1566 = vld [vmem:[%s304 + $0xa8] sm:$0xff]
      %v1567 = vld [vmem:[%s304 + $0xb0] sm:$0xff]
      %v1568 = vld [vmem:[%s304 + $0xb8] sm:$0xff]
      %v1569 = vld [vmem:[%s304 + $0xc0] sm:$0xff]
      %v1570 = vld [vmem:[%s304 + $0xc8] sm:$0xff]
      %v1571 = vld [vmem:[%s304 + $0xd0] sm:$0xff]
      %v1572 = vld [vmem:[%s304 + $0xd8] sm:$0xff]
      %v1573 = vld [vmem:[%s304 + $0xe0] sm:$0xff]
      %v1574 = vld [vmem:[%s304 + $0xe8] sm:$0xff]
      %v1575 = vld [vmem:[%s304 + $0xf0] sm:$0xff]
      %v1576 = vld [vmem:[%s304 + $0xf8] sm:$0xff]
      %1609 = vrot.lane.b32.xlu0 %v1545, 6
      %v1610 = vpop.permute.xlu0 %1609
      %1611 = vrot.lane.b32.xlu0 %v1546, 6
      %v1612 = vpop.permute.xlu0 %1611
      %1613 = vrot.lane.b32.xlu0 %v1547, 6
      %v1614 = vpop.permute.xlu0 %1613
      %1615 = vrot.lane.b32.xlu0 %v1548, 6
      %v1616 = vpop.permute.xlu0 %1615
      %1617 = vrot.lane.b32.xlu0 %v1549, 6
      %v1618 = vpop.permute.xlu0 %1617
      %1619 = vrot.lane.b32.xlu0 %v1550, 6
      %v1620 = vpop.permute.xlu0 %1619
      %1621 = vrot.lane.b32.xlu0 %v1551, 6
      %v1622 = vpop.permute.xlu0 %1621
      %1623 = vrot.lane.b32.xlu0 %v1552, 6
      %v1624 = vpop.permute.xlu0 %1623
      %1625 = vrot.lane.b32.xlu0 %v1553, 6
      %v1626 = vpop.permute.xlu0 %1625
      %1627 = vrot.lane.b32.xlu0 %v1554, 6
      %v1628 = vpop.permute.xlu0 %1627
      %1629 = vrot.lane.b32.xlu0 %v1555, 6
      %v1630 = vpop.permute.xlu0 %1629
      %1631 = vrot.lane.b32.xlu0 %v1556, 6
      %v1632 = vpop.permute.xlu0 %1631
      %1633 = vrot.lane.b32.xlu0 %v1557, 6
      %v1634 = vpop.permute.xlu0 %1633
      %1635 = vrot.lane.b32.xlu0 %v1558, 6
      %v1636 = vpop.permute.xlu0 %1635
      %1637 = vrot.lane.b32.xlu0 %v1559, 6
      %v1638 = vpop.permute.xlu0 %1637
      %1639 = vrot.lane.b32.xlu0 %v1560, 6
      %v1640 = vpop.permute.xlu0 %1639
      %1641 = vrot.lane.b32.xlu0 %v1561, 6
      %v1642 = vpop.permute.xlu0 %1641
      %1643 = vrot.lane.b32.xlu0 %v1562, 6
      %v1644 = vpop.permute.xlu0 %1643
      %1645 = vrot.lane.b32.xlu0 %v1563, 6
      %v1646 = vpop.permute.xlu0 %1645
      %1647 = vrot.lane.b32.xlu0 %v1564, 6
      %v1648 = vpop.permute.xlu0 %1647
      %1649 = vrot.lane.b32.xlu0 %v1565, 6
      %v1650 = vpop.permute.xlu0 %1649
      %1651 = vrot.lane.b32.xlu0 %v1566, 6
      %v1652 = vpop.permute.xlu0 %1651
      %1653 = vrot.lane.b32.xlu0 %v1567, 6
      %v1654 = vpop.permute.xlu0 %1653
      %1655 = vrot.lane.b32.xlu0 %v1568, 6
      %v1656 = vpop.permute.xlu0 %1655
      %1657 = vrot.lane.b32.xlu0 %v1569, 6
      %v1658 = vpop.permute.xlu0 %1657
      %1659 = vrot.lane.b32.xlu0 %v1570, 6
      %v1660 = vpop.permute.xlu0 %1659
      %1661 = vrot.lane.b32.xlu0 %v1571, 6
      %v1662 = vpop.permute.xlu0 %1661
      %1663 = vrot.lane.b32.xlu0 %v1572, 6
      %v1664 = vpop.permute.xlu0 %1663
      %1665 = vrot.lane.b32.xlu0 %v1573, 6
      %v1666 = vpop.permute.xlu0 %1665
      %1667 = vrot.lane.b32.xlu0 %v1574, 6
      %v1668 = vpop.permute.xlu0 %1667
      %1669 = vrot.lane.b32.xlu0 %v1575, 6
      %v1670 = vpop.permute.xlu0 %1669
      %1671 = vrot.lane.b32.xlu0 %v1576, 6
      %v1672 = vpop.permute.xlu0 %1671
      %v1705 = vsub.f32 %v1545, %v1610
      %v1706 = vsub.f32 %v1546, %v1612
      %v1707 = vsub.f32 %v1547, %v1614
      %v1708 = vsub.f32 %v1548, %v1616
      %v1709 = vsub.f32 %v1549, %v1618
      %v1710 = vsub.f32 %v1550, %v1620
      %v1711 = vsub.f32 %v1551, %v1622
      %v1712 = vsub.f32 %v1552, %v1624
      %v1713 = vsub.f32 %v1553, %v1626
      %v1714 = vsub.f32 %v1554, %v1628
      %v1715 = vsub.f32 %v1555, %v1630
      %v1716 = vsub.f32 %v1556, %v1632
      %v1717 = vsub.f32 %v1557, %v1634
      %v1718 = vsub.f32 %v1558, %v1636
      %v1719 = vsub.f32 %v1559, %v1638
      %v1720 = vsub.f32 %v1560, %v1640
      %v1721 = vsub.f32 %v1561, %v1642
      %v1722 = vsub.f32 %v1562, %v1644
      %v1723 = vsub.f32 %v1563, %v1646
      %v1724 = vsub.f32 %v1564, %v1648
      %v1725 = vsub.f32 %v1565, %v1650
      %v1726 = vsub.f32 %v1566, %v1652
      %v1727 = vsub.f32 %v1567, %v1654
      %v1728 = vsub.f32 %v1568, %v1656
      %v1729 = vsub.f32 %v1569, %v1658
      %v1730 = vsub.f32 %v1570, %v1660
      %v1731 = vsub.f32 %v1571, %v1662
      %v1732 = vsub.f32 %v1572, %v1664
      %v1733 = vsub.f32 %v1573, %v1666
      %v1734 = vsub.f32 %v1574, %v1668
      %v1735 = vsub.f32 %v1575, %v1670
      %v1736 = vsub.f32 %v1576, %v1672
      %1737 = vrot.lane.b32.xlu0 %v1545, 122
      %v1738 = vpop.permute.xlu0 %1737
      %1739 = vrot.lane.b32.xlu0 %v1546, 122
      %v1740 = vpop.permute.xlu0 %1739
      %1741 = vrot.lane.b32.xlu0 %v1547, 122
      %v1742 = vpop.permute.xlu0 %1741
      %1743 = vrot.lane.b32.xlu0 %v1548, 122
      %v1744 = vpop.permute.xlu0 %1743
      %1745 = vrot.lane.b32.xlu0 %v1549, 122
      %v1746 = vpop.permute.xlu0 %1745
      %1747 = vrot.lane.b32.xlu0 %v1550, 122
      %v1748 = vpop.permute.xlu0 %1747
      %1749 = vrot.lane.b32.xlu0 %v1551, 122
      %v1750 = vpop.permute.xlu0 %1749
      %1751 = vrot.lane.b32.xlu0 %v1552, 122
      %v1752 = vpop.permute.xlu0 %1751
      %1753 = vrot.lane.b32.xlu0 %v1553, 122
      %v1754 = vpop.permute.xlu0 %1753
      %1755 = vrot.lane.b32.xlu0 %v1554, 122
      %v1756 = vpop.permute.xlu0 %1755
      %1757 = vrot.lane.b32.xlu0 %v1555, 122
      %v1758 = vpop.permute.xlu0 %1757
      %1759 = vrot.lane.b32.xlu0 %v1556, 122
      %v1760 = vpop.permute.xlu0 %1759
      %1761 = vrot.lane.b32.xlu0 %v1557, 122
      %v1762 = vpop.permute.xlu0 %1761
      %1763 = vrot.lane.b32.xlu0 %v1558, 122
      %v1764 = vpop.permute.xlu0 %1763
      %1765 = vrot.lane.b32.xlu0 %v1559, 122
      %v1766 = vpop.permute.xlu0 %1765
      %1767 = vrot.lane.b32.xlu0 %v1560, 122
      %v1768 = vpop.permute.xlu0 %1767
      %1769 = vrot.lane.b32.xlu0 %v1561, 122
      %v1770 = vpop.permute.xlu0 %1769
      %1771 = vrot.lane.b32.xlu0 %v1562, 122
      %v1772 = vpop.permute.xlu0 %1771
      %1773 = vrot.lane.b32.xlu0 %v1563, 122
      %v1774 = vpop.permute.xlu0 %1773
      %1775 = vrot.lane.b32.xlu0 %v1564, 122
      %v1776 = vpop.permute.xlu0 %1775
      %1777 = vrot.lane.b32.xlu0 %v1565, 122
      %v1778 = vpop.permute.xlu0 %1777
      %1779 = vrot.lane.b32.xlu0 %v1566, 122
      %v1780 = vpop.permute.xlu0 %1779
      %1781 = vrot.lane.b32.xlu0 %v1567, 122
      %v1782 = vpop.permute.xlu0 %1781
      %1783 = vrot.lane.b32.xlu0 %v1568, 122
      %v1784 = vpop.permute.xlu0 %1783
      %1785 = vrot.lane.b32.xlu0 %v1569, 122
      %v1786 = vpop.permute.xlu0 %1785
      %1787 = vrot.lane.b32.xlu0 %v1570, 122
      %v1788 = vpop.permute.xlu0 %1787
      %1789 = vrot.lane.b32.xlu0 %v1571, 122
      %v1790 = vpop.permute.xlu0 %1789
      %1791 = vrot.lane.b32.xlu0 %v1572, 122
      %v1792 = vpop.permute.xlu0 %1791
      %1793 = vrot.lane.b32.xlu0 %v1573, 122
      %v1794 = vpop.permute.xlu0 %1793
      %1795 = vrot.lane.b32.xlu0 %v1574, 122
      %v1796 = vpop.permute.xlu0 %1795
      %1797 = vrot.lane.b32.xlu0 %v1575, 122
      %v1798 = vpop.permute.xlu0 %1797
      %1799 = vrot.lane.b32.xlu0 %v1576, 122
      %v1800 = vpop.permute.xlu0 %1799
      %v1833 = vadd.f32 %v1545, %v1738
      %v1834 = vadd.f32 %v1546, %v1740
      %v1835 = vadd.f32 %v1547, %v1742
      %v1836 = vadd.f32 %v1548, %v1744
      %v1837 = vadd.f32 %v1549, %v1746
      %v1838 = vadd.f32 %v1550, %v1748
      %v1839 = vadd.f32 %v1551, %v1750
      %v1840 = vadd.f32 %v1552, %v1752
      %v1841 = vadd.f32 %v1553, %v1754
      %v1842 = vadd.f32 %v1554, %v1756
      %v1843 = vadd.f32 %v1555, %v1758
      %v1844 = vadd.f32 %v1556, %v1760
      %v1845 = vadd.f32 %v1557, %v1762
      %v1846 = vadd.f32 %v1558, %v1764
      %v1847 = vadd.f32 %v1559, %v1766
      %v1848 = vadd.f32 %v1560, %v1768
      %v1849 = vadd.f32 %v1561, %v1770
      %v1850 = vadd.f32 %v1562, %v1772
      %v1851 = vadd.f32 %v1563, %v1774
      %v1852 = vadd.f32 %v1564, %v1776
      %v1853 = vadd.f32 %v1565, %v1778
      %v1854 = vadd.f32 %v1566, %v1780
      %v1855 = vadd.f32 %v1567, %v1782
      %v1856 = vadd.f32 %v1568, %v1784
      %v1857 = vadd.f32 %v1569, %v1786
      %v1858 = vadd.f32 %v1570, %v1788
      %v1859 = vadd.f32 %v1571, %v1790
      %v1860 = vadd.f32 %v1572, %v1792
      %v1861 = vadd.f32 %v1573, %v1794
      %v1862 = vadd.f32 %v1574, %v1796
      %v1863 = vadd.f32 %v1575, %v1798
      %v1864 = vadd.f32 %v1576, %v1800
      %v1865 = vmul.f32 %v1833, 0.5
      %v1866 = vmul.f32 %v1834, 0.5
      %v1867 = vmul.f32 %v1835, 0.5
      %v1868 = vmul.f32 %v1836, 0.5
      %v1869 = vmul.f32 %v1837, 0.5
      %v1870 = vmul.f32 %v1838, 0.5
      %v1871 = vmul.f32 %v1839, 0.5
      %v1872 = vmul.f32 %v1840, 0.5
      %v1873 = vmul.f32 %v1841, 0.5
      %v1874 = vmul.f32 %v1842, 0.5
      %v1875 = vmul.f32 %v1843, 0.5
      %v1876 = vmul.f32 %v1844, 0.5
      %v1877 = vmul.f32 %v1845, 0.5
      %v1878 = vmul.f32 %v1846, 0.5
      %v1879 = vmul.f32 %v1847, 0.5
      %v1880 = vmul.f32 %v1848, 0.5
      %v1881 = vmul.f32 %v1849, 0.5
      %v1882 = vmul.f32 %v1850, 0.5
      %v1883 = vmul.f32 %v1851, 0.5
      %v1884 = vmul.f32 %v1852, 0.5
      %v1885 = vmul.f32 %v1853, 0.5
      %v1886 = vmul.f32 %v1854, 0.5
      %v1887 = vmul.f32 %v1855, 0.5
      %v1888 = vmul.f32 %v1856, 0.5
      %v1889 = vmul.f32 %v1857, 0.5
      %v1890 = vmul.f32 %v1858, 0.5
      %v1891 = vmul.f32 %v1859, 0.5
      %v1892 = vmul.f32 %v1860, 0.5
      %v1893 = vmul.f32 %v1861, 0.5
      %v1894 = vmul.f32 %v1862, 0.5
      %v1895 = vmul.f32 %v1863, 0.5
      %v1896 = vmul.f32 %v1864, 0.5
      %v1897 = vmul.f32 %v1513, 1.442695
      %v1898 = vpow.pop %v1897
      %v1899 = vmul.f32 %v1514, 1.442695
      %v1900 = vpow.pop %v1899
      %v1901 = vmul.f32 %v1515, 1.442695
      %v1902 = vpow.pop %v1901
      %v1903 = vmul.f32 %v1516, 1.442695
      %v1904 = vpow.pop %v1903
      %v1905 = vmul.f32 %v1517, 1.442695
      %v1906 = vpow.pop %v1905
      %v1907 = vmul.f32 %v1518, 1.442695
      %v1908 = vpow.pop %v1907
      %v1909 = vmul.f32 %v1519, 1.442695
      %v1910 = vpow.pop %v1909
      %v1911 = vmul.f32 %v1520, 1.442695
      %v1912 = vpow.pop %v1911
      %v1913 = vmul.f32 %v1521, 1.442695
      %v1914 = vpow.pop %v1913
      %v1915 = vmul.f32 %v1522, 1.442695
      %v1916 = vpow.pop %v1915
      %v1917 = vmul.f32 %v1523, 1.442695
      %v1918 = vpow.pop %v1917
      %v1919 = vmul.f32 %v1524, 1.442695
      %v1920 = vpow.pop %v1919
      %v1921 = vmul.f32 %v1525, 1.442695
      %v1922 = vpow.pop %v1921
      %v1923 = vmul.f32 %v1526, 1.442695
      %v1924 = vpow.pop %v1923
      %v1925 = vmul.f32 %v1527, 1.442695
      %v1926 = vpow.pop %v1925
      %v1927 = vmul.f32 %v1528, 1.442695
      %v1928 = vpow.pop %v1927
      %v1929 = vmul.f32 %v1529, 1.442695
      %v1930 = vpow.pop %v1929
      %v1931 = vmul.f32 %v1530, 1.442695
      %v1932 = vpow.pop %v1931
      %v1933 = vmul.f32 %v1531, 1.442695
      %v1934 = vpow.pop %v1933
      %v1935 = vmul.f32 %v1532, 1.442695
      %v1936 = vpow.pop %v1935
      %v1937 = vmul.f32 %v1533, 1.442695
      %v1938 = vpow.pop %v1937
      %v1939 = vmul.f32 %v1534, 1.442695
      %v1940 = vpow.pop %v1939
      %v1941 = vmul.f32 %v1535, 1.442695
      %v1942 = vpow.pop %v1941
      %v1943 = vmul.f32 %v1536, 1.442695
      %v1944 = vpow.pop %v1943
      %v1945 = vmul.f32 %v1537, 1.442695
      %v1946 = vpow.pop %v1945
      %v1947 = vmul.f32 %v1538, 1.442695
      %v1948 = vpow.pop %v1947
      %v1949 = vmul.f32 %v1539, 1.442695
      %v1950 = vpow.pop %v1949
      %v1951 = vmul.f32 %v1540, 1.442695
      %v1952 = vpow.pop %v1951
      %v1953 = vmul.f32 %v1541, 1.442695
      %v1954 = vpow.pop %v1953
      %v1955 = vmul.f32 %v1542, 1.442695
      %v1956 = vpow.pop %v1955
      %v1957 = vmul.f32 %v1543, 1.442695
      %v1958 = vpow.pop %v1957
      %v1959 = vmul.f32 %v1544, 1.442695
      %v1960 = vpow.pop %v1959
      %1993 = vrot.lane.b32.xlu0 %v1898, 125
      %v1994 = vpop.permute.xlu0 %1993
      %1995 = vrot.lane.b32.xlu0 %v1900, 125
      %v1996 = vpop.permute.xlu0 %1995
      %1997 = vrot.lane.b32.xlu0 %v1902, 125
      %v1998 = vpop.permute.xlu0 %1997
      %1999 = vrot.lane.b32.xlu0 %v1904, 125
      %v2000 = vpop.permute.xlu0 %1999
      %2001 = vrot.lane.b32.xlu0 %v1906, 125
      %v2002 = vpop.permute.xlu0 %2001
      %2003 = vrot.lane.b32.xlu0 %v1908, 125
      %v2004 = vpop.permute.xlu0 %2003
      %2005 = vrot.lane.b32.xlu0 %v1910, 125
      %v2006 = vpop.permute.xlu0 %2005
      %2007 = vrot.lane.b32.xlu0 %v1912, 125
      %v2008 = vpop.permute.xlu0 %2007
      %2009 = vrot.lane.b32.xlu0 %v1914, 125
      %v2010 = vpop.permute.xlu0 %2009
      %2011 = vrot.lane.b32.xlu0 %v1916, 125
      %v2012 = vpop.permute.xlu0 %2011
      %2013 = vrot.lane.b32.xlu0 %v1918, 125
      %v2014 = vpop.permute.xlu0 %2013
      %2015 = vrot.lane.b32.xlu0 %v1920, 125
      %v2016 = vpop.permute.xlu0 %2015
      %2017 = vrot.lane.b32.xlu0 %v1922, 125
      %v2018 = vpop.permute.xlu0 %2017
      %2019 = vrot.lane.b32.xlu0 %v1924, 125
      %v2020 = vpop.permute.xlu0 %2019
      %2021 = vrot.lane.b32.xlu0 %v1926, 125
      %v2022 = vpop.permute.xlu0 %2021
      %2023 = vrot.lane.b32.xlu0 %v1928, 125
      %v2024 = vpop.permute.xlu0 %2023
      %2025 = vrot.lane.b32.xlu0 %v1930, 125
      %v2026 = vpop.permute.xlu0 %2025
      %2027 = vrot.lane.b32.xlu0 %v1932, 125
      %v2028 = vpop.permute.xlu0 %2027
      %2029 = vrot.lane.b32.xlu0 %v1934, 125
      %v2030 = vpop.permute.xlu0 %2029
      %2031 = vrot.lane.b32.xlu0 %v1936, 125
      %v2032 = vpop.permute.xlu0 %2031
      %2033 = vrot.lane.b32.xlu0 %v1938, 125
      %v2034 = vpop.permute.xlu0 %2033
      %2035 = vrot.lane.b32.xlu0 %v1940, 125
      %v2036 = vpop.permute.xlu0 %2035
      %2037 = vrot.lane.b32.xlu0 %v1942, 125
      %v2038 = vpop.permute.xlu0 %2037
      %2039 = vrot.lane.b32.xlu0 %v1944, 125
      %v2040 = vpop.permute.xlu0 %2039
      %2041 = vrot.lane.b32.xlu0 %v1946, 125
      %v2042 = vpop.permute.xlu0 %2041
      %2043 = vrot.lane.b32.xlu0 %v1948, 125
      %v2044 = vpop.permute.xlu0 %2043
      %2045 = vrot.lane.b32.xlu0 %v1950, 125
      %v2046 = vpop.permute.xlu0 %2045
      %2047 = vrot.lane.b32.xlu0 %v1952, 125
      %v2048 = vpop.permute.xlu0 %2047
      %2049 = vrot.lane.b32.xlu0 %v1954, 125
      %v2050 = vpop.permute.xlu0 %2049
      %2051 = vrot.lane.b32.xlu0 %v1956, 125
      %v2052 = vpop.permute.xlu0 %2051
      %2053 = vrot.lane.b32.xlu0 %v1958, 125
      %v2054 = vpop.permute.xlu0 %2053
      %2055 = vrot.lane.b32.xlu0 %v1960, 125
      %v2056 = vpop.permute.xlu0 %2055
      %v2089 = vmul.f32 %v1705, %v1994
      %v2090 = vmul.f32 %v1706, %v1996
      %v2091 = vmul.f32 %v1707, %v1998
      %v2092 = vmul.f32 %v1708, %v2000
      %v2093 = vmul.f32 %v1709, %v2002
      %v2094 = vmul.f32 %v1710, %v2004
      %v2095 = vmul.f32 %v1711, %v2006
      %v2096 = vmul.f32 %v1712, %v2008
      %v2097 = vmul.f32 %v1713, %v2010
      %v2098 = vmul.f32 %v1714, %v2012
      %v2099 = vmul.f32 %v1715, %v2014
      %v2100 = vmul.f32 %v1716, %v2016
      %v2101 = vmul.f32 %v1717, %v2018
      %v2102 = vmul.f32 %v1718, %v2020
      %v2103 = vmul.f32 %v1719, %v2022
      %v2104 = vmul.f32 %v1720, %v2024
      %v2105 = vmul.f32 %v1721, %v2026
      %v2106 = vmul.f32 %v1722, %v2028
      %v2107 = vmul.f32 %v1723, %v2030
      %v2108 = vmul.f32 %v1724, %v2032
      %v2109 = vmul.f32 %v1725, %v2034
      %v2110 = vmul.f32 %v1726, %v2036
      %v2111 = vmul.f32 %v1727, %v2038
      %v2112 = vmul.f32 %v1728, %v2040
      %v2113 = vmul.f32 %v1729, %v2042
      %v2114 = vmul.f32 %v1730, %v2044
      %v2115 = vmul.f32 %v1731, %v2046
      %v2116 = vmul.f32 %v1732, %v2048
      %v2117 = vmul.f32 %v1733, %v2050
      %v2118 = vmul.f32 %v1734, %v2052
      %v2119 = vmul.f32 %v1735, %v2054
      %v2120 = vmul.f32 %v1736, %v2056
      %2153 = vrot.lane.b32.xlu0 %v1449, 3
      %v2154 = vpop.permute.xlu0 %2153
      %2155 = vrot.lane.b32.xlu0 %v1450, 3
      %v2156 = vpop.permute.xlu0 %2155
      %2157 = vrot.lane.b32.xlu0 %v1451, 3
      %v2158 = vpop.permute.xlu0 %2157
      %2159 = vrot.lane.b32.xlu0 %v1452, 3
      %v2160 = vpop.permute.xlu0 %2159
      %2161 = vrot.lane.b32.xlu0 %v1453, 3
      %v2162 = vpop.permute.xlu0 %2161
      %2163 = vrot.lane.b32.xlu0 %v1454, 3
      %v2164 = vpop.permute.xlu0 %2163
      %2165 = vrot.lane.b32.xlu0 %v1455, 3
      %v2166 = vpop.permute.xlu0 %2165
      %2167 = vrot.lane.b32.xlu0 %v1456, 3
      %v2168 = vpop.permute.xlu0 %2167
      %2169 = vrot.lane.b32.xlu0 %v1457, 3
      %v2170 = vpop.permute.xlu0 %2169
      %2171 = vrot.lane.b32.xlu0 %v1458, 3
      %v2172 = vpop.permute.xlu0 %2171
      %2173 = vrot.lane.b32.xlu0 %v1459, 3
      %v2174 = vpop.permute.xlu0 %2173
      %2175 = vrot.lane.b32.xlu0 %v1460, 3
      %v2176 = vpop.permute.xlu0 %2175
      %2177 = vrot.lane.b32.xlu0 %v1461, 3
      %v2178 = vpop.permute.xlu0 %2177
      %2179 = vrot.lane.b32.xlu0 %v1462, 3
      %v2180 = vpop.permute.xlu0 %2179
      %2181 = vrot.lane.b32.xlu0 %v1463, 3
      %v2182 = vpop.permute.xlu0 %2181
      %2183 = vrot.lane.b32.xlu0 %v1464, 3
      %v2184 = vpop.permute.xlu0 %2183
      %2185 = vrot.lane.b32.xlu0 %v1465, 3
      %v2186 = vpop.permute.xlu0 %2185
      %2187 = vrot.lane.b32.xlu0 %v1466, 3
      %v2188 = vpop.permute.xlu0 %2187
      %2189 = vrot.lane.b32.xlu0 %v1467, 3
      %v2190 = vpop.permute.xlu0 %2189
      %2191 = vrot.lane.b32.xlu0 %v1468, 3
      %v2192 = vpop.permute.xlu0 %2191
      %2193 = vrot.lane.b32.xlu0 %v1469, 3
      %v2194 = vpop.permute.xlu0 %2193
      %2195 = vrot.lane.b32.xlu0 %v1470, 3
      %v2196 = vpop.permute.xlu0 %2195
      %2197 = vrot.lane.b32.xlu0 %v1471, 3
      %v2198 = vpop.permute.xlu0 %2197
      %2199 = vrot.lane.b32.xlu0 %v1472, 3
      %v2200 = vpop.permute.xlu0 %2199
      %2201 = vrot.lane.b32.xlu0 %v1473, 3
      %v2202 = vpop.permute.xlu0 %2201
      %2203 = vrot.lane.b32.xlu0 %v1474, 3
      %v2204 = vpop.permute.xlu0 %2203
      %2205 = vrot.lane.b32.xlu0 %v1475, 3
      %v2206 = vpop.permute.xlu0 %2205
      %2207 = vrot.lane.b32.xlu0 %v1476, 3
      %v2208 = vpop.permute.xlu0 %2207
      %2209 = vrot.lane.b32.xlu0 %v1477, 3
      %v2210 = vpop.permute.xlu0 %2209
      %2211 = vrot.lane.b32.xlu0 %v1478, 3
      %v2212 = vpop.permute.xlu0 %2211
      %2213 = vrot.lane.b32.xlu0 %v1479, 3
      %v2214 = vpop.permute.xlu0 %2213
      %2215 = vrot.lane.b32.xlu0 %v1480, 3
      %v2216 = vpop.permute.xlu0 %2215
      %v2249 = vmul.f32 %v1705, %v2154
      %v2250 = vmul.f32 %v1706, %v2156
      %v2251 = vmul.f32 %v1707, %v2158
      %v2252 = vmul.f32 %v1708, %v2160
      %v2253 = vmul.f32 %v1709, %v2162
      %v2254 = vmul.f32 %v1710, %v2164
      %v2255 = vmul.f32 %v1711, %v2166
      %v2256 = vmul.f32 %v1712, %v2168
      %v2257 = vmul.f32 %v1713, %v2170
      %v2258 = vmul.f32 %v1714, %v2172
      %v2259 = vmul.f32 %v1715, %v2174
      %v2260 = vmul.f32 %v1716, %v2176
      %v2261 = vmul.f32 %v1717, %v2178
      %v2262 = vmul.f32 %v1718, %v2180
      %v2263 = vmul.f32 %v1719, %v2182
      %v2264 = vmul.f32 %v1720, %v2184
      %v2265 = vmul.f32 %v1721, %v2186
      %v2266 = vmul.f32 %v1722, %v2188
      %v2267 = vmul.f32 %v1723, %v2190
      %v2268 = vmul.f32 %v1724, %v2192
      %v2269 = vmul.f32 %v1725, %v2194
      %v2270 = vmul.f32 %v1726, %v2196
      %v2271 = vmul.f32 %v1727, %v2198
      %v2272 = vmul.f32 %v1728, %v2200
      %v2273 = vmul.f32 %v1729, %v2202
      %v2274 = vmul.f32 %v1730, %v2204
      %v2275 = vmul.f32 %v1731, %v2206
      %v2276 = vmul.f32 %v1732, %v2208
      %v2277 = vmul.f32 %v1733, %v2210
      %v2278 = vmul.f32 %v1734, %v2212
      %v2279 = vmul.f32 %v1735, %v2214
      %v2280 = vmul.f32 %v1736, %v2216
      %2313 = vrot.lane.b32.xlu0 %v2249, 122
      %v2314 = vpop.permute.xlu0 %2313
      %2315 = vrot.lane.b32.xlu0 %v2250, 122
      %v2316 = vpop.permute.xlu0 %2315
      %2317 = vrot.lane.b32.xlu0 %v2251, 122
      %v2318 = vpop.permute.xlu0 %2317
      %2319 = vrot.lane.b32.xlu0 %v2252, 122
      %v2320 = vpop.permute.xlu0 %2319
      %2321 = vrot.lane.b32.xlu0 %v2253, 122
      %v2322 = vpop.permute.xlu0 %2321
      %2323 = vrot.lane.b32.xlu0 %v2254, 122
      %v2324 = vpop.permute.xlu0 %2323
      %2325 = vrot.lane.b32.xlu0 %v2255, 122
      %v2326 = vpop.permute.xlu0 %2325
      %2327 = vrot.lane.b32.xlu0 %v2256, 122
      %v2328 = vpop.permute.xlu0 %2327
      %2329 = vrot.lane.b32.xlu0 %v2257, 122
      %v2330 = vpop.permute.xlu0 %2329
      %2331 = vrot.lane.b32.xlu0 %v2258, 122
      %v2332 = vpop.permute.xlu0 %2331
      %2333 = vrot.lane.b32.xlu0 %v2259, 122
      %v2334 = vpop.permute.xlu0 %2333
      %2335 = vrot.lane.b32.xlu0 %v2260, 122
      %v2336 = vpop.permute.xlu0 %2335
      %2337 = vrot.lane.b32.xlu0 %v2261, 122
      %v2338 = vpop.permute.xlu0 %2337
      %2339 = vrot.lane.b32.xlu0 %v2262, 122
      %v2340 = vpop.permute.xlu0 %2339
      %2341 = vrot.lane.b32.xlu0 %v2263, 122
      %v2342 = vpop.permute.xlu0 %2341
      %2343 = vrot.lane.b32.xlu0 %v2264, 122
      %v2344 = vpop.permute.xlu0 %2343
      %2345 = vrot.lane.b32.xlu0 %v2265, 122
      %v2346 = vpop.permute.xlu0 %2345
      %2347 = vrot.lane.b32.xlu0 %v2266, 122
      %v2348 = vpop.permute.xlu0 %2347
      %2349 = vrot.lane.b32.xlu0 %v2267, 122
      %v2350 = vpop.permute.xlu0 %2349
      %2351 = vrot.lane.b32.xlu0 %v2268, 122
      %v2352 = vpop.permute.xlu0 %2351
      %2353 = vrot.lane.b32.xlu0 %v2269, 122
      %v2354 = vpop.permute.xlu0 %2353
      %2355 = vrot.lane.b32.xlu0 %v2270, 122
      %v2356 = vpop.permute.xlu0 %2355
      %2357 = vrot.lane.b32.xlu0 %v2271, 122
      %v2358 = vpop.permute.xlu0 %2357
      %2359 = vrot.lane.b32.xlu0 %v2272, 122
      %v2360 = vpop.permute.xlu0 %2359
      %2361 = vrot.lane.b32.xlu0 %v2273, 122
      %v2362 = vpop.permute.xlu0 %2361
      %2363 = vrot.lane.b32.xlu0 %v2274, 122
      %v2364 = vpop.permute.xlu0 %2363
      %2365 = vrot.lane.b32.xlu0 %v2275, 122
      %v2366 = vpop.permute.xlu0 %2365
      %2367 = vrot.lane.b32.xlu0 %v2276, 122
      %v2368 = vpop.permute.xlu0 %2367
      %2369 = vrot.lane.b32.xlu0 %v2277, 122
      %v2370 = vpop.permute.xlu0 %2369
      %2371 = vrot.lane.b32.xlu0 %v2278, 122
      %v2372 = vpop.permute.xlu0 %2371
      %2373 = vrot.lane.b32.xlu0 %v2279, 122
      %v2374 = vpop.permute.xlu0 %2373
      %2375 = vrot.lane.b32.xlu0 %v2280, 122
      %v2376 = vpop.permute.xlu0 %2375
      %v2409 = vadd.f32 %v1865, %v2314
      %v2410 = vadd.f32 %v1866, %v2316
      %v2411 = vadd.f32 %v1867, %v2318
      %v2412 = vadd.f32 %v1868, %v2320
      %v2413 = vadd.f32 %v1869, %v2322
      %v2414 = vadd.f32 %v1870, %v2324
      %v2415 = vadd.f32 %v1871, %v2326
      %v2416 = vadd.f32 %v1872, %v2328
      %v2417 = vadd.f32 %v1873, %v2330
      %v2418 = vadd.f32 %v1874, %v2332
      %v2419 = vadd.f32 %v1875, %v2334
      %v2420 = vadd.f32 %v1876, %v2336
      %v2421 = vadd.f32 %v1877, %v2338
      %v2422 = vadd.f32 %v1878, %v2340
      %v2423 = vadd.f32 %v1879, %v2342
      %v2424 = vadd.f32 %v1880, %v2344
      %v2425 = vadd.f32 %v1881, %v2346
      %v2426 = vadd.f32 %v1882, %v2348
      %v2427 = vadd.f32 %v1883, %v2350
      %v2428 = vadd.f32 %v1884, %v2352
      %v2429 = vadd.f32 %v1885, %v2354
      %v2430 = vadd.f32 %v1886, %v2356
      %v2431 = vadd.f32 %v1887, %v2358
      %v2432 = vadd.f32 %v1888, %v2360
      %v2433 = vadd.f32 %v1889, %v2362
      %v2434 = vadd.f32 %v1890, %v2364
      %v2435 = vadd.f32 %v1891, %v2366
      %v2436 = vadd.f32 %v1892, %v2368
      %v2437 = vadd.f32 %v1893, %v2370
      %v2438 = vadd.f32 %v1894, %v2372
      %v2439 = vadd.f32 %v1895, %v2374
      %v2440 = vadd.f32 %v1896, %v2376
      %v2441 = vmul.f32 %v2089, 0.5
      %v2442 = vmul.f32 %v2090, 0.5
      %v2443 = vmul.f32 %v2091, 0.5
      %v2444 = vmul.f32 %v2092, 0.5
      %v2445 = vmul.f32 %v2093, 0.5
      %v2446 = vmul.f32 %v2094, 0.5
      %v2447 = vmul.f32 %v2095, 0.5
      %v2448 = vmul.f32 %v2096, 0.5
      %v2449 = vmul.f32 %v2097, 0.5
      %v2450 = vmul.f32 %v2098, 0.5
      %v2451 = vmul.f32 %v2099, 0.5
      %v2452 = vmul.f32 %v2100, 0.5
      %v2453 = vmul.f32 %v2101, 0.5
      %v2454 = vmul.f32 %v2102, 0.5
      %v2455 = vmul.f32 %v2103, 0.5
      %v2456 = vmul.f32 %v2104, 0.5
      %v2457 = vmul.f32 %v2105, 0.5
      %v2458 = vmul.f32 %v2106, 0.5
      %v2459 = vmul.f32 %v2107, 0.5
      %v2460 = vmul.f32 %v2108, 0.5
      %v2461 = vmul.f32 %v2109, 0.5
      %v2462 = vmul.f32 %v2110, 0.5
      %v2463 = vmul.f32 %v2111, 0.5
      %v2464 = vmul.f32 %v2112, 0.5
      %v2465 = vmul.f32 %v2113, 0.5
      %v2466 = vmul.f32 %v2114, 0.5
      %v2467 = vmul.f32 %v2115, 0.5
      %v2468 = vmul.f32 %v2116, 0.5
      %v2469 = vmul.f32 %v2117, 0.5
      %v2470 = vmul.f32 %v2118, 0.5
      %v2471 = vmul.f32 %v2119, 0.5
      %v2472 = vmul.f32 %v2120, 0.5
      %2505 = vrot.lane.b32.xlu0 %v2441, 122
      %v2506 = vpop.permute.xlu0 %2505
      %2507 = vrot.lane.b32.xlu0 %v2442, 122
      %v2508 = vpop.permute.xlu0 %2507
      %2509 = vrot.lane.b32.xlu0 %v2443, 122
      %v2510 = vpop.permute.xlu0 %2509
      %2511 = vrot.lane.b32.xlu0 %v2444, 122
      %v2512 = vpop.permute.xlu0 %2511
      %2513 = vrot.lane.b32.xlu0 %v2445, 122
      %v2514 = vpop.permute.xlu0 %2513
      %2515 = vrot.lane.b32.xlu0 %v2446, 122
      %v2516 = vpop.permute.xlu0 %2515
      %2517 = vrot.lane.b32.xlu0 %v2447, 122
      %v2518 = vpop.permute.xlu0 %2517
      %2519 = vrot.lane.b32.xlu0 %v2448, 122
      %v2520 = vpop.permute.xlu0 %2519
      %2521 = vrot.lane.b32.xlu0 %v2449, 122
      %v2522 = vpop.permute.xlu0 %2521
      %2523 = vrot.lane.b32.xlu0 %v2450, 122
      %v2524 = vpop.permute.xlu0 %2523
      %2525 = vrot.lane.b32.xlu0 %v2451, 122
      %v2526 = vpop.permute.xlu0 %2525
      %2527 = vrot.lane.b32.xlu0 %v2452, 122
      %v2528 = vpop.permute.xlu0 %2527
      %2529 = vrot.lane.b32.xlu0 %v2453, 122
      %v2530 = vpop.permute.xlu0 %2529
      %2531 = vrot.lane.b32.xlu0 %v2454, 122
      %v2532 = vpop.permute.xlu0 %2531
      %2533 = vrot.lane.b32.xlu0 %v2455, 122
      %v2534 = vpop.permute.xlu0 %2533
      %2535 = vrot.lane.b32.xlu0 %v2456, 122
      %v2536 = vpop.permute.xlu0 %2535
      %2537 = vrot.lane.b32.xlu0 %v2457, 122
      %v2538 = vpop.permute.xlu0 %2537
      %2539 = vrot.lane.b32.xlu0 %v2458, 122
      %v2540 = vpop.permute.xlu0 %2539
      %2541 = vrot.lane.b32.xlu0 %v2459, 122
      %v2542 = vpop.permute.xlu0 %2541
      %2543 = vrot.lane.b32.xlu0 %v2460, 122
      %v2544 = vpop.permute.xlu0 %2543
      %2545 = vrot.lane.b32.xlu0 %v2461, 122
      %v2546 = vpop.permute.xlu0 %2545
      %2547 = vrot.lane.b32.xlu0 %v2462, 122
      %v2548 = vpop.permute.xlu0 %2547
      %2549 = vrot.lane.b32.xlu0 %v2463, 122
      %v2550 = vpop.permute.xlu0 %2549
      %2551 = vrot.lane.b32.xlu0 %v2464, 122
      %v2552 = vpop.permute.xlu0 %2551
      %2553 = vrot.lane.b32.xlu0 %v2465, 122
      %v2554 = vpop.permute.xlu0 %2553
      %2555 = vrot.lane.b32.xlu0 %v2466, 122
      %v2556 = vpop.permute.xlu0 %2555
      %2557 = vrot.lane.b32.xlu0 %v2467, 122
      %v2558 = vpop.permute.xlu0 %2557
      %2559 = vrot.lane.b32.xlu0 %v2468, 122
      %v2560 = vpop.permute.xlu0 %2559
      %2561 = vrot.lane.b32.xlu0 %v2469, 122
      %v2562 = vpop.permute.xlu0 %2561
      %2563 = vrot.lane.b32.xlu0 %v2470, 122
      %v2564 = vpop.permute.xlu0 %2563
      %2565 = vrot.lane.b32.xlu0 %v2471, 122
      %v2566 = vpop.permute.xlu0 %2565
      %2567 = vrot.lane.b32.xlu0 %v2472, 122
      %v2568 = vpop.permute.xlu0 %2567
      %v2601 = vsub.f32 %v2409, %v2506
      %v2602 = vsub.f32 %v2410, %v2508
      %v2603 = vsub.f32 %v2411, %v2510
      %v2604 = vsub.f32 %v2412, %v2512
      %v2605 = vsub.f32 %v2413, %v2514
      %v2606 = vsub.f32 %v2414, %v2516
      %v2607 = vsub.f32 %v2415, %v2518
      %v2608 = vsub.f32 %v2416, %v2520
      %v2609 = vsub.f32 %v2417, %v2522
      %v2610 = vsub.f32 %v2418, %v2524
      %v2611 = vsub.f32 %v2419, %v2526
      %v2612 = vsub.f32 %v2420, %v2528
      %v2613 = vsub.f32 %v2421, %v2530
      %v2614 = vsub.f32 %v2422, %v2532
      %v2615 = vsub.f32 %v2423, %v2534
      %v2616 = vsub.f32 %v2424, %v2536
      %v2617 = vsub.f32 %v2425, %v2538
      %v2618 = vsub.f32 %v2426, %v2540
      %v2619 = vsub.f32 %v2427, %v2542
      %v2620 = vsub.f32 %v2428, %v2544
      %v2621 = vsub.f32 %v2429, %v2546
      %v2622 = vsub.f32 %v2430, %v2548
      %v2623 = vsub.f32 %v2431, %v2550
      %v2624 = vsub.f32 %v2432, %v2552
      %v2625 = vsub.f32 %v2433, %v2554
      %v2626 = vsub.f32 %v2434, %v2556
      %v2627 = vsub.f32 %v2435, %v2558
      %v2628 = vsub.f32 %v2436, %v2560
      %v2629 = vsub.f32 %v2437, %v2562
      %v2630 = vsub.f32 %v2438, %v2564
      %v2631 = vsub.f32 %v2439, %v2566
      %v2632 = vsub.f32 %v2440, %v2568
      %v2633 = vmax.f32 %v2601, 0.0
      %v2634 = vmax.f32 %v2602, 0.0
      %v2635 = vmax.f32 %v2603, 0.0
      %v2636 = vmax.f32 %v2604, 0.0
      %v2637 = vmax.f32 %v2605, 0.0
      %v2638 = vmax.f32 %v2606, 0.0
      %v2639 = vmax.f32 %v2607, 0.0
      %v2640 = vmax.f32 %v2608, 0.0
      %v2641 = vmax.f32 %v2609, 0.0
      %v2642 = vmax.f32 %v2610, 0.0
      %v2643 = vmax.f32 %v2611, 0.0
      %v2644 = vmax.f32 %v2612, 0.0
      %v2645 = vmax.f32 %v2613, 0.0
      %v2646 = vmax.f32 %v2614, 0.0
      %v2647 = vmax.f32 %v2615, 0.0
      %v2648 = vmax.f32 %v2616, 0.0
      %v2649 = vmax.f32 %v2617, 0.0
      %v2650 = vmax.f32 %v2618, 0.0
      %v2651 = vmax.f32 %v2619, 0.0
      %v2652 = vmax.f32 %v2620, 0.0
      %v2653 = vmax.f32 %v2621, 0.0
      %v2654 = vmax.f32 %v2622, 0.0
      %v2655 = vmax.f32 %v2623, 0.0
      %v2656 = vmax.f32 %v2624, 0.0
      %v2657 = vmax.f32 %v2625, 0.0
      %v2658 = vmax.f32 %v2626, 0.0
      %v2659 = vmax.f32 %v2627, 0.0
      %v2660 = vmax.f32 %v2628, 0.0
      %v2661 = vmax.f32 %v2629, 0.0
      %v2662 = vmax.f32 %v2630, 0.0
      %v2663 = vmax.f32 %v2631, 0.0
      %v2664 = vmax.f32 %v2632, 0.0
      %v2665 = vmin.f32 %v2633, 64.0
      %v2666 = vmin.f32 %v2634, 64.0
      %v2667 = vmin.f32 %v2635, 64.0
      %v2668 = vmin.f32 %v2636, 64.0
      %v2669 = vmin.f32 %v2637, 64.0
      %v2670 = vmin.f32 %v2638, 64.0
      %v2671 = vmin.f32 %v2639, 64.0
      %v2672 = vmin.f32 %v2640, 64.0
      %v2673 = vmin.f32 %v2641, 64.0
      %v2674 = vmin.f32 %v2642, 64.0
      %v2675 = vmin.f32 %v2643, 64.0
      %v2676 = vmin.f32 %v2644, 64.0
      %v2677 = vmin.f32 %v2645, 64.0
      %v2678 = vmin.f32 %v2646, 64.0
      %v2679 = vmin.f32 %v2647, 64.0
      %v2680 = vmin.f32 %v2648, 64.0
      %v2681 = vmin.f32 %v2649, 64.0
      %v2682 = vmin.f32 %v2650, 64.0
      %v2683 = vmin.f32 %v2651, 64.0
      %v2684 = vmin.f32 %v2652, 64.0
      %v2685 = vmin.f32 %v2653, 64.0
      %v2686 = vmin.f32 %v2654, 64.0
      %v2687 = vmin.f32 %v2655, 64.0
      %v2688 = vmin.f32 %v2656, 64.0
      %v2689 = vmin.f32 %v2657, 64.0
      %v2690 = vmin.f32 %v2658, 64.0
      %v2691 = vmin.f32 %v2659, 64.0
      %v2692 = vmin.f32 %v2660, 64.0
      %v2693 = vmin.f32 %v2661, 64.0
      %v2694 = vmin.f32 %v2662, 64.0
      %v2695 = vmin.f32 %v2663, 64.0
      %v2696 = vmin.f32 %v2664, 64.0
      %2697 = vst.msk [vmem:[%s316] sm:$0xff] %vm1416, %v2665
      %2698 = vst.msk [vmem:[%s316 + $0x8] sm:$0xff] %vm1416, %v2666
      %2699 = vst.msk [vmem:[%s316 + $0x10] sm:$0xff] %vm1416, %v2667
      %2700 = vst.msk [vmem:[%s316 + $0x18] sm:$0xff] %vm1416, %v2668
      %2701 = vst.msk [vmem:[%s316 + $0x20] sm:$0xff] %vm1416, %v2669
      %2702 = vst.msk [vmem:[%s316 + $0x28] sm:$0xff] %vm1416, %v2670
      %2703 = vst.msk [vmem:[%s316 + $0x30] sm:$0xff] %vm1416, %v2671
      %2704 = vst.msk [vmem:[%s316 + $0x38] sm:$0xff] %vm1416, %v2672
      %2705 = vst.msk [vmem:[%s316 + $0x40] sm:$0xff] %vm1416, %v2673
      %2706 = vst.msk [vmem:[%s316 + $0x48] sm:$0xff] %vm1416, %v2674
      %2707 = vst.msk [vmem:[%s316 + $0x50] sm:$0xff] %vm1416, %v2675
      %2708 = vst.msk [vmem:[%s316 + $0x58] sm:$0xff] %vm1416, %v2676
      %2709 = vst.msk [vmem:[%s316 + $0x60] sm:$0xff] %vm1416, %v2677
      %2710 = vst.msk [vmem:[%s316 + $0x68] sm:$0xff] %vm1416, %v2678
      %2711 = vst.msk [vmem:[%s316 + $0x70] sm:$0xff] %vm1416, %v2679
      %2712 = vst.msk [vmem:[%s316 + $0x78] sm:$0xff] %vm1416, %v2680
      %2713 = vst.msk [vmem:[%s316 + $0x80] sm:$0xff] %vm1416, %v2681
      %2714 = vst.msk [vmem:[%s316 + $0x88] sm:$0xff] %vm1416, %v2682
      %2715 = vst.msk [vmem:[%s316 + $0x90] sm:$0xff] %vm1416, %v2683
      %2716 = vst.msk [vmem:[%s316 + $0x98] sm:$0xff] %vm1416, %v2684
      %2717 = vst.msk [vmem:[%s316 + $0xa0] sm:$0xff] %vm1416, %v2685
      %2718 = vst.msk [vmem:[%s316 + $0xa8] sm:$0xff] %vm1416, %v2686
      %2719 = vst.msk [vmem:[%s316 + $0xb0] sm:$0xff] %vm1416, %v2687
      %2720 = vst.msk [vmem:[%s316 + $0xb8] sm:$0xff] %vm1416, %v2688
      %2721 = vst.msk [vmem:[%s316 + $0xc0] sm:$0xff] %vm1416, %v2689
      %2722 = vst.msk [vmem:[%s316 + $0xc8] sm:$0xff] %vm1416, %v2690
      %2723 = vst.msk [vmem:[%s316 + $0xd0] sm:$0xff] %vm1416, %v2691
      %2724 = vst.msk [vmem:[%s316 + $0xd8] sm:$0xff] %vm1416, %v2692
      %2725 = vst.msk [vmem:[%s316 + $0xe0] sm:$0xff] %vm1416, %v2693
      %2726 = vst.msk [vmem:[%s316 + $0xe8] sm:$0xff] %vm1416, %v2694
      %2727 = vst.msk [vmem:[%s316 + $0xf0] sm:$0xff] %vm1416, %v2695
      %2728 = vst.msk [vmem:[%s316 + $0xf8] sm:$0xff] %vm1416, %v2696
      %vm2729 = vcmask 48152
      %2730 = vst.msk [vmem:[%s316] sm:$0xff] %vm2729, %v2665
      %2731 = vst.msk [vmem:[%s316 + $0x8] sm:$0xff] %vm2729, %v2666
      %2732 = vst.msk [vmem:[%s316 + $0x10] sm:$0xff] %vm2729, %v2667
      %2733 = vst.msk [vmem:[%s316 + $0x18] sm:$0xff] %vm2729, %v2668
      %2734 = vst.msk [vmem:[%s316 + $0x20] sm:$0xff] %vm2729, %v2669
      %2735 = vst.msk [vmem:[%s316 + $0x28] sm:$0xff] %vm2729, %v2670
      %2736 = vst.msk [vmem:[%s316 + $0x30] sm:$0xff] %vm2729, %v2671
      %2737 = vst.msk [vmem:[%s316 + $0x38] sm:$0xff] %vm2729, %v2672
      %2738 = vst.msk [vmem:[%s316 + $0x40] sm:$0xff] %vm2729, %v2673
      %2739 = vst.msk [vmem:[%s316 + $0x48] sm:$0xff] %vm2729, %v2674
      %2740 = vst.msk [vmem:[%s316 + $0x50] sm:$0xff] %vm2729, %v2675
      %2741 = vst.msk [vmem:[%s316 + $0x58] sm:$0xff] %vm2729, %v2676
      %2742 = vst.msk [vmem:[%s316 + $0x60] sm:$0xff] %vm2729, %v2677
      %2743 = vst.msk [vmem:[%s316 + $0x68] sm:$0xff] %vm2729, %v2678
      %2744 = vst.msk [vmem:[%s316 + $0x70] sm:$0xff] %vm2729, %v2679
      %2745 = vst.msk [vmem:[%s316 + $0x78] sm:$0xff] %vm2729, %v2680
      %2746 = vst.msk [vmem:[%s316 + $0x80] sm:$0xff] %vm2729, %v2681
      %2747 = vst.msk [vmem:[%s316 + $0x88] sm:$0xff] %vm2729, %v2682
      %2748 = vst.msk [vmem:[%s316 + $0x90] sm:$0xff] %vm2729, %v2683
      %2749 = vst.msk [vmem:[%s316 + $0x98] sm:$0xff] %vm2729, %v2684
      %2750 = vst.msk [vmem:[%s316 + $0xa0] sm:$0xff] %vm2729, %v2685
      %2751 = vst.msk [vmem:[%s316 + $0xa8] sm:$0xff] %vm2729, %v2686
      %2752 = vst.msk [vmem:[%s316 + $0xb0] sm:$0xff] %vm2729, %v2687
      %2753 = vst.msk [vmem:[%s316 + $0xb8] sm:$0xff] %vm2729, %v2688
      %2754 = vst.msk [vmem:[%s316 + $0xc0] sm:$0xff] %vm2729, %v2689
      %2755 = vst.msk [vmem:[%s316 + $0xc8] sm:$0xff] %vm2729, %v2690
      %2756 = vst.msk [vmem:[%s316 + $0xd0] sm:$0xff] %vm2729, %v2691
      %2757 = vst.msk [vmem:[%s316 + $0xd8] sm:$0xff] %vm2729, %v2692
      %2758 = vst.msk [vmem:[%s316 + $0xe0] sm:$0xff] %vm2729, %v2693
      %2759 = vst.msk [vmem:[%s316 + $0xe8] sm:$0xff] %vm2729, %v2694
      %2760 = vst.msk [vmem:[%s316 + $0xf0] sm:$0xff] %vm2729, %v2695
      %2761 = vst.msk [vmem:[%s316 + $0xf8] sm:$0xff] %vm2729, %v2696
      %v2762 = vadd.f32 %v2409, %v2506
      %v2763 = vadd.f32 %v2410, %v2508
      %v2764 = vadd.f32 %v2411, %v2510
      %v2765 = vadd.f32 %v2412, %v2512
      %v2766 = vadd.f32 %v2413, %v2514
      %v2767 = vadd.f32 %v2414, %v2516
      %v2768 = vadd.f32 %v2415, %v2518
      %v2769 = vadd.f32 %v2416, %v2520
      %v2770 = vadd.f32 %v2417, %v2522
      %v2771 = vadd.f32 %v2418, %v2524
      %v2772 = vadd.f32 %v2419, %v2526
      %v2773 = vadd.f32 %v2420, %v2528
      %v2774 = vadd.f32 %v2421, %v2530
      %v2775 = vadd.f32 %v2422, %v2532
      %v2776 = vadd.f32 %v2423, %v2534
      %v2777 = vadd.f32 %v2424, %v2536
      %v2778 = vadd.f32 %v2425, %v2538
      %v2779 = vadd.f32 %v2426, %v2540
      %v2780 = vadd.f32 %v2427, %v2542
      %v2781 = vadd.f32 %v2428, %v2544
      %v2782 = vadd.f32 %v2429, %v2546
      %v2783 = vadd.f32 %v2430, %v2548
      %v2784 = vadd.f32 %v2431, %v2550
      %v2785 = vadd.f32 %v2432, %v2552
      %v2786 = vadd.f32 %v2433, %v2554
      %v2787 = vadd.f32 %v2434, %v2556
      %v2788 = vadd.f32 %v2435, %v2558
      %v2789 = vadd.f32 %v2436, %v2560
      %v2790 = vadd.f32 %v2437, %v2562
      %v2791 = vadd.f32 %v2438, %v2564
      %v2792 = vadd.f32 %v2439, %v2566
      %v2793 = vadd.f32 %v2440, %v2568
      %v2794 = vmax.f32 %v2762, 0.0
      %v2795 = vmax.f32 %v2763, 0.0
      %v2796 = vmax.f32 %v2764, 0.0
      %v2797 = vmax.f32 %v2765, 0.0
      %v2798 = vmax.f32 %v2766, 0.0
      %v2799 = vmax.f32 %v2767, 0.0
      %v2800 = vmax.f32 %v2768, 0.0
      %v2801 = vmax.f32 %v2769, 0.0
      %v2802 = vmax.f32 %v2770, 0.0
      %v2803 = vmax.f32 %v2771, 0.0
      %v2804 = vmax.f32 %v2772, 0.0
      %v2805 = vmax.f32 %v2773, 0.0
      %v2806 = vmax.f32 %v2774, 0.0
      %v2807 = vmax.f32 %v2775, 0.0
      %v2808 = vmax.f32 %v2776, 0.0
      %v2809 = vmax.f32 %v2777, 0.0
      %v2810 = vmax.f32 %v2778, 0.0
      %v2811 = vmax.f32 %v2779, 0.0
      %v2812 = vmax.f32 %v2780, 0.0
      %v2813 = vmax.f32 %v2781, 0.0
      %v2814 = vmax.f32 %v2782, 0.0
      %v2815 = vmax.f32 %v2783, 0.0
      %v2816 = vmax.f32 %v2784, 0.0
      %v2817 = vmax.f32 %v2785, 0.0
      %v2818 = vmax.f32 %v2786, 0.0
      %v2819 = vmax.f32 %v2787, 0.0
      %v2820 = vmax.f32 %v2788, 0.0
      %v2821 = vmax.f32 %v2789, 0.0
      %v2822 = vmax.f32 %v2790, 0.0
      %v2823 = vmax.f32 %v2791, 0.0
      %v2824 = vmax.f32 %v2792, 0.0
      %v2825 = vmax.f32 %v2793, 0.0
      %v2826 = vmin.f32 %v2794, 64.0
      %v2827 = vmin.f32 %v2795, 64.0
      %v2828 = vmin.f32 %v2796, 64.0
      %v2829 = vmin.f32 %v2797, 64.0
      %v2830 = vmin.f32 %v2798, 64.0
      %v2831 = vmin.f32 %v2799, 64.0
      %v2832 = vmin.f32 %v2800, 64.0
      %v2833 = vmin.f32 %v2801, 64.0
      %v2834 = vmin.f32 %v2802, 64.0
      %v2835 = vmin.f32 %v2803, 64.0
      %v2836 = vmin.f32 %v2804, 64.0
      %v2837 = vmin.f32 %v2805, 64.0
      %v2838 = vmin.f32 %v2806, 64.0
      %v2839 = vmin.f32 %v2807, 64.0
      %v2840 = vmin.f32 %v2808, 64.0
      %v2841 = vmin.f32 %v2809, 64.0
      %v2842 = vmin.f32 %v2810, 64.0
      %v2843 = vmin.f32 %v2811, 64.0
      %v2844 = vmin.f32 %v2812, 64.0
      %v2845 = vmin.f32 %v2813, 64.0
      %v2846 = vmin.f32 %v2814, 64.0
      %v2847 = vmin.f32 %v2815, 64.0
      %v2848 = vmin.f32 %v2816, 64.0
      %v2849 = vmin.f32 %v2817, 64.0
      %v2850 = vmin.f32 %v2818, 64.0
      %v2851 = vmin.f32 %v2819, 64.0
      %v2852 = vmin.f32 %v2820, 64.0
      %v2853 = vmin.f32 %v2821, 64.0
      %v2854 = vmin.f32 %v2822, 64.0
      %v2855 = vmin.f32 %v2823, 64.0
      %v2856 = vmin.f32 %v2824, 64.0
      %v2857 = vmin.f32 %v2825, 64.0
      %2890 = vrot.lane.b32.xlu0 %v2826, 6
      %v2891 = vpop.permute.xlu0 %2890
      %2892 = vrot.lane.b32.xlu0 %v2827, 6
      %v2893 = vpop.permute.xlu0 %2892
      %2894 = vrot.lane.b32.xlu0 %v2828, 6
      %v2895 = vpop.permute.xlu0 %2894
      %2896 = vrot.lane.b32.xlu0 %v2829, 6
      %v2897 = vpop.permute.xlu0 %2896
      %2898 = vrot.lane.b32.xlu0 %v2830, 6
      %v2899 = vpop.permute.xlu0 %2898
      %2900 = vrot.lane.b32.xlu0 %v2831, 6
      %v2901 = vpop.permute.xlu0 %2900
      %2902 = vrot.lane.b32.xlu0 %v2832, 6
      %v2903 = vpop.permute.xlu0 %2902
      %2904 = vrot.lane.b32.xlu0 %v2833, 6
      %v2905 = vpop.permute.xlu0 %2904
      %2906 = vrot.lane.b32.xlu0 %v2834, 6
      %v2907 = vpop.permute.xlu0 %2906
      %2908 = vrot.lane.b32.xlu0 %v2835, 6
      %v2909 = vpop.permute.xlu0 %2908
      %2910 = vrot.lane.b32.xlu0 %v2836, 6
      %v2911 = vpop.permute.xlu0 %2910
      %2912 = vrot.lane.b32.xlu0 %v2837, 6
      %v2913 = vpop.permute.xlu0 %2912
      %2914 = vrot.lane.b32.xlu0 %v2838, 6
      %v2915 = vpop.permute.xlu0 %2914
      %2916 = vrot.lane.b32.xlu0 %v2839, 6
      %v2917 = vpop.permute.xlu0 %2916
      %2918 = vrot.lane.b32.xlu0 %v2840, 6
      %v2919 = vpop.permute.xlu0 %2918
      %2920 = vrot.lane.b32.xlu0 %v2841, 6
      %v2921 = vpop.permute.xlu0 %2920
      %2922 = vrot.lane.b32.xlu0 %v2842, 6
      %v2923 = vpop.permute.xlu0 %2922
      %2924 = vrot.lane.b32.xlu0 %v2843, 6
      %v2925 = vpop.permute.xlu0 %2924
      %2926 = vrot.lane.b32.xlu0 %v2844, 6
      %v2927 = vpop.permute.xlu0 %2926
      %2928 = vrot.lane.b32.xlu0 %v2845, 6
      %v2929 = vpop.permute.xlu0 %2928
      %2930 = vrot.lane.b32.xlu0 %v2846, 6
      %v2931 = vpop.permute.xlu0 %2930
      %2932 = vrot.lane.b32.xlu0 %v2847, 6
      %v2933 = vpop.permute.xlu0 %2932
      %2934 = vrot.lane.b32.xlu0 %v2848, 6
      %v2935 = vpop.permute.xlu0 %2934
      %2936 = vrot.lane.b32.xlu0 %v2849, 6
      %v2937 = vpop.permute.xlu0 %2936
      %2938 = vrot.lane.b32.xlu0 %v2850, 6
      %v2939 = vpop.permute.xlu0 %2938
      %2940 = vrot.lane.b32.xlu0 %v2851, 6
      %v2941 = vpop.permute.xlu0 %2940
      %2942 = vrot.lane.b32.xlu0 %v2852, 6
      %v2943 = vpop.permute.xlu0 %2942
      %2944 = vrot.lane.b32.xlu0 %v2853, 6
      %v2945 = vpop.permute.xlu0 %2944
      %2946 = vrot.lane.b32.xlu0 %v2854, 6
      %v2947 = vpop.permute.xlu0 %2946
      %2948 = vrot.lane.b32.xlu0 %v2855, 6
      %v2949 = vpop.permute.xlu0 %2948
      %2950 = vrot.lane.b32.xlu0 %v2856, 6
      %v2951 = vpop.permute.xlu0 %2950
      %2952 = vrot.lane.b32.xlu0 %v2857, 6
      %v2953 = vpop.permute.xlu0 %2952
      %vm2986 = vcmask 72752
      %2987 = vst.msk [vmem:[%s316] sm:$0xff] %vm2986, %v2891
      %2988 = vst.msk [vmem:[%s316 + $0x8] sm:$0xff] %vm2986, %v2893
      %2989 = vst.msk [vmem:[%s316 + $0x10] sm:$0xff] %vm2986, %v2895
      %2990 = vst.msk [vmem:[%s316 + $0x18] sm:$0xff] %vm2986, %v2897
      %2991 = vst.msk [vmem:[%s316 + $0x20] sm:$0xff] %vm2986, %v2899
      %2992 = vst.msk [vmem:[%s316 + $0x28] sm:$0xff] %vm2986, %v2901
      %2993 = vst.msk [vmem:[%s316 + $0x30] sm:$0xff] %vm2986, %v2903
      %2994 = vst.msk [vmem:[%s316 + $0x38] sm:$0xff] %vm2986, %v2905
      %2995 = vst.msk [vmem:[%s316 + $0x40] sm:$0xff] %vm2986, %v2907
      %2996 = vst.msk [vmem:[%s316 + $0x48] sm:$0xff] %vm2986, %v2909
      %2997 = vst.msk [vmem:[%s316 + $0x50] sm:$0xff] %vm2986, %v2911
      %2998 = vst.msk [vmem:[%s316 + $0x58] sm:$0xff] %vm2986, %v2913
      %2999 = vst.msk [vmem:[%s316 + $0x60] sm:$0xff] %vm2986, %v2915
      %3000 = vst.msk [vmem:[%s316 + $0x68] sm:$0xff] %vm2986, %v2917
      %3001 = vst.msk [vmem:[%s316 + $0x70] sm:$0xff] %vm2986, %v2919
      %3002 = vst.msk [vmem:[%s316 + $0x78] sm:$0xff] %vm2986, %v2921
      %3003 = vst.msk [vmem:[%s316 + $0x80] sm:$0xff] %vm2986, %v2923
      %3004 = vst.msk [vmem:[%s316 + $0x88] sm:$0xff] %vm2986, %v2925
      %3005 = vst.msk [vmem:[%s316 + $0x90] sm:$0xff] %vm2986, %v2927
      %3006 = vst.msk [vmem:[%s316 + $0x98] sm:$0xff] %vm2986, %v2929
      %3007 = vst.msk [vmem:[%s316 + $0xa0] sm:$0xff] %vm2986, %v2931
      %3008 = vst.msk [vmem:[%s316 + $0xa8] sm:$0xff] %vm2986, %v2933
      %3009 = vst.msk [vmem:[%s316 + $0xb0] sm:$0xff] %vm2986, %v2935
      %3010 = vst.msk [vmem:[%s316 + $0xb8] sm:$0xff] %vm2986, %v2937
      %3011 = vst.msk [vmem:[%s316 + $0xc0] sm:$0xff] %vm2986, %v2939
      %3012 = vst.msk [vmem:[%s316 + $0xc8] sm:$0xff] %vm2986, %v2941
      %3013 = vst.msk [vmem:[%s316 + $0xd0] sm:$0xff] %vm2986, %v2943
      %3014 = vst.msk [vmem:[%s316 + $0xd8] sm:$0xff] %vm2986, %v2945
      %3015 = vst.msk [vmem:[%s316 + $0xe0] sm:$0xff] %vm2986, %v2947
      %3016 = vst.msk [vmem:[%s316 + $0xe8] sm:$0xff] %vm2986, %v2949
      %3017 = vst.msk [vmem:[%s316 + $0xf0] sm:$0xff] %vm2986, %v2951
      %3018 = vst.msk [vmem:[%s316 + $0xf8] sm:$0xff] %vm2986, %v2953
      %vm3019 = vcmask 97352
      %3020 = vst.msk [vmem:[%s316] sm:$0xff] %vm3019, %v2891
      %3021 = vst.msk [vmem:[%s316 + $0x8] sm:$0xff] %vm3019, %v2893
      %3022 = vst.msk [vmem:[%s316 + $0x10] sm:$0xff] %vm3019, %v2895
      %3023 = vst.msk [vmem:[%s316 + $0x18] sm:$0xff] %vm3019, %v2897
      %3024 = vst.msk [vmem:[%s316 + $0x20] sm:$0xff] %vm3019, %v2899
      %3025 = vst.msk [vmem:[%s316 + $0x28] sm:$0xff] %vm3019, %v2901
      %3026 = vst.msk [vmem:[%s316 + $0x30] sm:$0xff] %vm3019, %v2903
      %3027 = vst.msk [vmem:[%s316 + $0x38] sm:$0xff] %vm3019, %v2905
      %3028 = vst.msk [vmem:[%s316 + $0x40] sm:$0xff] %vm3019, %v2907
      %3029 = vst.msk [vmem:[%s316 + $0x48] sm:$0xff] %vm3019, %v2909
      %3030 = vst.msk [vmem:[%s316 + $0x50] sm:$0xff] %vm3019, %v2911
      %3031 = vst.msk [vmem:[%s316 + $0x58] sm:$0xff] %vm3019, %v2913
      %3032 = vst.msk [vmem:[%s316 + $0x60] sm:$0xff] %vm3019, %v2915
      %3033 = vst.msk [vmem:[%s316 + $0x68] sm:$0xff] %vm3019, %v2917
      %3034 = vst.msk [vmem:[%s316 + $0x70] sm:$0xff] %vm3019, %v2919
      %3035 = vst.msk [vmem:[%s316 + $0x78] sm:$0xff] %vm3019, %v2921
      %3036 = vst.msk [vmem:[%s316 + $0x80] sm:$0xff] %vm3019, %v2923
      %3037 = vst.msk [vmem:[%s316 + $0x88] sm:$0xff] %vm3019, %v2925
      %3038 = vst.msk [vmem:[%s316 + $0x90] sm:$0xff] %vm3019, %v2927
      %3039 = vst.msk [vmem:[%s316 + $0x98] sm:$0xff] %vm3019, %v2929
      %3040 = vst.msk [vmem:[%s316 + $0xa0] sm:$0xff] %vm3019, %v2931
      %3041 = vst.msk [vmem:[%s316 + $0xa8] sm:$0xff] %vm3019, %v2933
      %3042 = vst.msk [vmem:[%s316 + $0xb0] sm:$0xff] %vm3019, %v2935
      %3043 = vst.msk [vmem:[%s316 + $0xb8] sm:$0xff] %vm3019, %v2937
      %3044 = vst.msk [vmem:[%s316 + $0xc0] sm:$0xff] %vm3019, %v2939
      %3045 = vst.msk [vmem:[%s316 + $0xc8] sm:$0xff] %vm3019, %v2941
      %3046 = vst.msk [vmem:[%s316 + $0xd0] sm:$0xff] %vm3019, %v2943
      %3047 = vst.msk [vmem:[%s316 + $0xd8] sm:$0xff] %vm3019, %v2945
      %3048 = vst.msk [vmem:[%s316 + $0xe0] sm:$0xff] %vm3019, %v2947
      %3049 = vst.msk [vmem:[%s316 + $0xe8] sm:$0xff] %vm3019, %v2949
      %3050 = vst.msk [vmem:[%s316 + $0xf0] sm:$0xff] %vm3019, %v2951
      %3051 = vst.msk [vmem:[%s316 + $0xf8] sm:$0xff] %vm3019, %v2953
      %s3052 = smul.u32 32, %s19
      %p3053 = scmp.lt.s32.totalorder %s3052, 63
      %s3054 = scalar_select %p3053, %s3052, 63
      %s3055 = smul.addr %s3054, 8
      %s3056 = scalar_lea.vmem %s6, %s3055
      %s3057 = smul.u32 32, %s19
      %p3058 = scmp.lt.s32.totalorder %s3057, 63
      %s3059 = scalar_select %p3058, %s3057, 63
      %s3060 = smul.addr %s3059, 8
      %s3061 = scalar_lea.vmem %s7, %s3060
      // Predicated region
      $region45: #{tpu_custom_call.1} parent=43 // pred_check
        %p3062 = pneg %p173
      $region46: #{tpu_custom_call.1} parent=43 // pred_check_branch
        %3064 = sbr.rel (%p3062) target = $region48
      $region47: #{tpu_custom_call.1} parent=43 // pred_region
        %s3065 = smul.u32 32, %s19
      $region48: #{tpu_custom_call.1} parent=43 // pred_fallthru
        _
      // Predicated region
      $region49: #{tpu_custom_call.1} parent=43 // pred_check
        %p3066 = pneg %p199
      $region50: #{tpu_custom_call.1} parent=43 // pred_check_branch
        %3068 = sbr.rel (%p3066) target = $region52
      $region51: #{tpu_custom_call.1} parent=43 // pred_region
        %s3069 = smul.u32 32, %s19
      $region52: #{tpu_custom_call.1} parent=43 // pred_fallthru
        _
    $region44: #{tpu_custom_call.1} parent=5 // pred_fallthru
      _
    %p3070 = scmp.le.s32.totalorder 2, %s14
    // Predicated region
    $region53: #{tpu_custom_call.1} parent=5 // pred_check
      %p3071 = pneg %p3070
    $region54: #{tpu_custom_call.1} parent=5 // pred_check_branch
      %3073 = sbr.rel (%p3071) target = $region56
    $region55: #{tpu_custom_call.1} parent=5 // pred_region
      %s3074 = ssub.s32 %s14, 2
      // Predicated region
      $region57: #{tpu_custom_call.1} parent=55 // pred_check
        %p3075 = pneg %p179
      $region58: #{tpu_custom_call.1} parent=55 // pred_check_branch
        %3077 = sbr.rel (%p3075) target = $region60
      $region59: #{tpu_custom_call.1} parent=55 // pred_region
        %s3078 = smul.u32 32, %s20
        %p3079 = scmp.lt.s32.totalorder %s3078, 63
        %s3080 = scalar_select %p3079, %s3078, 63
        %s3081 = smul.addr %s3080, 8
        %s3082 = scalar_lea.vmem %s6, %s3081
      $region60: #{tpu_custom_call.1} parent=55 // pred_fallthru
        _
      // Predicated region
      $region61: #{tpu_custom_call.1} parent=55 // pred_check
        %p3083 = pneg %p205
      $region62: #{tpu_custom_call.1} parent=55 // pred_check_branch
        %3085 = sbr.rel (%p3083) target = $region64
      $region63: #{tpu_custom_call.1} parent=55 // pred_region
        %s3086 = smul.u32 32, %s20
        %p3087 = scmp.lt.s32.totalorder %s3086, 63
        %s3088 = scalar_select %p3087, %s3086, 63
        %s3089 = smul.addr %s3088, 8
        %s3090 = scalar_lea.vmem %s7, %s3089
      $region64: #{tpu_custom_call.1} parent=55 // pred_fallthru
        _
    $region56: #{tpu_custom_call.1} parent=5 // pred_fallthru
      _
  $region6: #{tpu_custom_call.1} parent=0 // loop_footer
    %s18 = sadd.s32 1, %s14
  $region7: #{tpu_custom_call.1} parent=0 // loop_footer_branch
    %13 = sbr.rel target = $region3
  $region8: #{tpu_custom_call.1} parent=0 // loop_exit
    _

</llo_original>
